<compile_context>
chip_gen: v7x
topology: tpu7x:2x2x1
jax: 0.10.0
libtpu: 0.0.40
codegen_flags: <defaults>
</compile_context>

<pallas_src>
import functools

import jax
import jax.numpy as jnp
from jax.experimental import pallas as pl
from jax.experimental.pallas import tpu as pltpu

SCALE = 0.5 ** 0.5


# ----------------------------------------------------------------------------
# Fused _ResLayer kernel (one grid step = one batch element)
# ----------------------------------------------------------------------------
def _res_layer_kernel(x_ref, wc_ref, bc_ref, wm_ref, bm_ref,
                      w1_ref, b1_ref, w2_ref, b2_ref,
                      o_ref, hp_ref, *, Tt, Ts, k):
    pt = (k - 1) // 2
    ps = (k - 1) // 2
    causal_rows = k // 2 + 1            # kernel rows dt > k//2 are masked to zero
    C = x_ref.shape[-1]
    Cout = wm_ref.shape[-1]
    M = Tt * Ts

    # ---------------- Stage 1: 1x1 conv == channel matmul (bf16 in, f32 acc) -------------
    x = x_ref[...].reshape(M, C)                                  # f32 residual
    h = jnp.dot(x.astype(jnp.bfloat16), wc_ref[...],
                preferred_element_type=jnp.float32) + bc_ref[...]  # (M, C) f32

    # ---------------- Stage 2: masked k x k conv over a padded VMEM plane ----------------
    # Zero the padded scratch once per step, then write the interior in a single store.
    hp_ref[...] = jnp.zeros_like(hp_ref)
    hp_ref[pt:pt + Tt, ps:ps + Ts, :] = h.reshape(Tt, Ts, C).astype(hp_ref.dtype)

    acc = jnp.zeros((M, Cout), jnp.float32)
    for dt in range(causal_rows):       # whole-plane shifted taps: causal_rows*k big dots
        for ds in range(k):
            tap = hp_ref[dt:dt + Tt, ds:ds + Ts, :].reshape(M, C)  # bf16 (M, C)
            acc = acc + jnp.dot(tap, wm_ref[dt, ds],
                                preferred_element_type=jnp.float32)
    acc = acc + bm_ref[...]             # bias added once (hoisted out of tap loop)
    y = SCALE * (acc + x)               # first scaled residual, f32 (M, C)

    # ---------------- Stage 3: fc1 -> ReLU -> fc2 + second scaled residual ---------------
    h1 = jnp.dot(y.astype(jnp.bfloat16), w1_ref[...],
                 preferred_element_type=jnp.float32) + b1_ref[...]
    h1 = jnp.maximum(h1, 0.0)
    out = jnp.dot(h1.astype(jnp.bfloat16), w2_ref[...],
                  preferred_element_type=jnp.float32) + b2_ref[...]
    o_ref[...] = (SCALE * (out + y)).reshape(1, Tt, Ts, Cout).astype(o_ref.dtype)


def _full_spec(shape):
    n = len(shape)
    return pl.BlockSpec(shape, lambda b: (0,) * n)


# ----------------------------------------------------------------------------
# Full _ResLayer forward (drop_rate = 0.0, so both F.dropout calls are no-ops,
# exactly as in the PyTorch module where `if self.drop_rate:` is falsy).
# TODO(synk): drop_rate > 0 training-mode dropout not implemented (would need
#             pltpu.prng_*; torch RNG stream cannot be reproduced anyway).
# ----------------------------------------------------------------------------
def res_layer_forward(x, params, kernel_size):
    B, Tt, Ts, C = x.shape
    k = kernel_size
    pt = ps = (k - 1) // 2
    H = params["w_fc1"].shape[1]

    kern = functools.partial(_res_layer_kernel, Tt=Tt, Ts=Ts, k=k)
    bf16 = lambda a: a.astype(jnp.bfloat16)

    return pl.pallas_call(
        kern,
        out_shape=jax.ShapeDtypeStruct((B, Tt, Ts, C), x.dtype),
        grid_spec=pltpu.PrefetchScalarGridSpec(
            num_scalar_prefetch=0,
            grid=(B,),
            in_specs=[
                pl.BlockSpec((1, Tt, Ts, C), lambda b: (b, 0, 0, 0)),  # x / residual
                _full_spec((C, C)),        # w_conv1 (bf16)
                _full_spec((1, C)),        # b_conv1 (f32)
                _full_spec((k, k, C, C)),  # w_mconv (bf16, causal-masked)
                _full_spec((1, C)),        # b_mconv (f32)
                _full_spec((C, H)),        # w_fc1   (bf16)
                _full_spec((1, H)),        # b_fc1   (f32)
                _full_spec((H, C)),        # w_fc2   (bf16)
                _full_spec((1, C)),        # b_fc2   (f32)
            ],
            out_specs=pl.BlockSpec((1, Tt, Ts, C), lambda b: (b, 0, 0, 0)),
            scratch_shapes=[
                # zero-padded conv1 output plane, kept entirely in VMEM (bf16)
                pltpu.VMEM((Tt + 2 * pt, Ts + 2 * ps, C), jnp.bfloat16),
            ],
        ),
        compiler_params=pltpu.CompilerParams(
            dimension_semantics=("parallel",)),
    )(x,
      bf16(params["w_conv1"]), params["b_conv1"],
      bf16(params["w_mconv"]), params["b_mconv"],
      bf16(params["w_fc1"]), params["b_fc1"],
      bf16(params["w_fc2"]), params["b_fc2"])


# ----------------------------------------------------------------------------
# Pure-JAX reference of the same math (matched precision: bf16 MXU inputs,
# f32 accumulation) for the correctness check.
# ----------------------------------------------------------------------------
def ref_forward(x, params, k):
    B, Tt, Ts, C = x.shape
    pt = ps = (k - 1) // 2
    bf = lambda a: a.astype(jnp.bfloat16)
    x32 = x.astype(jnp.float32)

    h = jnp.einsum("btsc,cd->btsd", bf(x), bf(params["w_conv1"]),
                   preferred_element_type=jnp.float32) + params["b_conv1"][0]
    hp = jnp.pad(h.astype(jnp.bfloat16), ((0, 0), (pt, pt), (ps, ps), (0, 0)))
    conv = jnp.zeros((B, Tt, Ts, C), jnp.float32)
    for dt in range(k):       # masked rows of w_mconv are already zero
        for ds in range(k):
            tap = hp[:, dt:dt + Tt, ds:ds + Ts, :]
            conv = conv + jnp.einsum("btsc,cd->btsd", tap, bf(params["w_mconv"][dt, ds]),
                                     preferred_element_type=jnp.float32)
    conv = conv + params["b_mconv"][0]
    y = SCALE * (conv + x32)

    h1 = jnp.einsum("btsc,cd->btsd", bf(y), bf(params["w_fc1"]),
                    preferred_element_type=jnp.float32) + params["b_fc1"][0]
    h1 = jnp.maximum(h1, 0.0)
    out = jnp.einsum("btsc,cd->btsd", bf(h1), bf(params["w_fc2"]),
                     preferred_element_type=jnp.float32) + params["b_fc2"][0]
    return SCALE * (out + y)


# ----------------------------------------------------------------------------
# Deterministic parameter init (shapes follow the PyTorch __init__)
# ----------------------------------------------------------------------------
def init_params(key, num_features, kernel_size):
    C, k = num_features, kernel_size
    keys = jax.random.split(key, 4)

    def xavier(kk, fan_in, fan_out, shape):
        bound = (6.0 / (fan_in + fan_out)) ** 0.5
        return jax.random.uniform(kk, shape, jnp.float32, -bound, bound)

    # conv1: Conv2d(C, C, 1) -> weight stored as (Cin, Cout)
    w_conv1 = xavier(keys[0], C, C, (C, C))
    b_conv1 = jnp.zeros((1, C), jnp.float32)

    # mconv2: masked Conv2d(C, C, k) -> weight as (kh, kw, Cin, Cout), causal-masked
    w_mconv = xavier(keys[1], C * k * k, C * k * k, (k, k, C, C))
    row_idx = jnp.arange(k)[:, None, None, None]
    mask = (row_idx <= k // 2).astype(jnp.float32)   # zero future target rows
    w_mconv = w_mconv * mask
    b_mconv = jnp.zeros((1, C), jnp.float32)

    # fc1 / fc2 (xavier_uniform weights, zero bias), stored as (in, out)
    w_fc1 = xavier(keys[2], C, 4 * C, (C, 4 * C))
    b_fc1 = jnp.zeros((1, 4 * C), jnp.float32)
    w_fc2 = xavier(keys[3], 4 * C, C, (4 * C, C))
    b_fc2 = jnp.zeros((1, C), jnp.float32)

    return dict(w_conv1=w_conv1, b_conv1=b_conv1,
                w_mconv=w_mconv, b_mconv=b_mconv,
                w_fc1=w_fc1, b_fc1=b_fc1, w_fc2=w_fc2, b_fc2=b_fc2)


if __name__ == "__main__":
    B, Tt, Ts, C = 2, 8, 8, 16     # (batch, target len, source len, features)
    kernel_size = 3
    drop_rate = 0.0                # makes both `if self.drop_rate:` branches no-ops

    key = jax.random.PRNGKey(0)
    k_x, k_p = jax.random.split(key)
    x = jax.random.normal(k_x, (B, Tt, Ts, C), jnp.float32)
    params = init_params(k_p, C, kernel_size)

    out = jax.block_until_ready(res_layer_forward(x, params, kernel_size))
    ref = jax.block_until_ready(ref_forward(x, params, kernel_size))

    assert out.shape == (B, Tt, Ts, C)
    max_err = float(jnp.max(jnp.abs(out - ref)))
    assert jnp.allclose(out, ref, rtol=1e-2, atol=1e-2), \
        f"kernel mismatch vs reference (max abs err {max_err})"
    print("KERNEL_OK")
</pallas_src>

<mosaic_0001>
module attributes {stable_mosaic.version = 11 : i64} {
  func.func @_res_layer_kernel(%arg0: i32, %arg1: memref<1x8x8x16xf32, #tpu.memory_space<vmem>>, %arg2: memref<16x16xbf16, #tpu.memory_space<vmem>>, %arg3: memref<1x16xf32, #tpu.memory_space<vmem>>, %arg4: memref<3x3x16x16xbf16, #tpu.memory_space<vmem>>, %arg5: memref<1x16xf32, #tpu.memory_space<vmem>>, %arg6: memref<16x64xbf16, #tpu.memory_space<vmem>>, %arg7: memref<1x64xf32, #tpu.memory_space<vmem>>, %arg8: memref<64x16xbf16, #tpu.memory_space<vmem>>, %arg9: memref<1x16xf32, #tpu.memory_space<vmem>>, %arg10: memref<1x8x8x16xf32, #tpu.memory_space<vmem>>, %arg11: memref<10x10x16xbf16, #tpu.memory_space<vmem>>) attributes {dimension_semantics = [#tpu.dimension_semantics<parallel>], iteration_bounds = array<i64: 2>, scalar_prefetch = 0 : i64, scratch_operands = 1 : i64, tpu.core_type = #tpu.core_type<tc>, window_params = [{transform_indices = @transform_0, window_bounds = array<i64: 1, 8, 8, 16>}, {pipeline_mode = #tpu.pipeline_mode<synchronous>, transform_indices = @transform_1, window_bounds = array<i64: 16, 16>}, {pipeline_mode = #tpu.pipeline_mode<synchronous>, transform_indices = @transform_2, window_bounds = array<i64: 1, 16>}, {pipeline_mode = #tpu.pipeline_mode<synchronous>, transform_indices = @transform_3, window_bounds = array<i64: 3, 3, 16, 16>}, {pipeline_mode = #tpu.pipeline_mode<synchronous>, transform_indices = @transform_4, window_bounds = array<i64: 1, 16>}, {pipeline_mode = #tpu.pipeline_mode<synchronous>, transform_indices = @transform_5, window_bounds = array<i64: 16, 64>}, {pipeline_mode = #tpu.pipeline_mode<synchronous>, transform_indices = @transform_6, window_bounds = array<i64: 1, 64>}, {pipeline_mode = #tpu.pipeline_mode<synchronous>, transform_indices = @transform_7, window_bounds = array<i64: 64, 16>}, {pipeline_mode = #tpu.pipeline_mode<synchronous>, transform_indices = @transform_8, window_bounds = array<i64: 1, 16>}, {transform_indices = @transform_9, window_bounds = array<i64: 1, 8, 8, 16>}]} {
    %c0 = arith.constant 0 : index
    %c0_0 = arith.constant 0 : index
    %c0_1 = arith.constant 0 : index
    %c0_2 = arith.constant 0 : index
    %0 = vector.load %arg1[%c0, %c0_0, %c0_1, %c0_2] : memref<1x8x8x16xf32, #tpu.memory_space<vmem>>, vector<1x8x8x16xf32>
    %1 = vector.shape_cast %0 : vector<1x8x8x16xf32> to vector<64x16xf32>
    %2 = arith.truncf %1 : vector<64x16xf32> to vector<64x16xbf16>
    %c0_3 = arith.constant 0 : index
    %c0_4 = arith.constant 0 : index
    %3 = vector.load %arg2[%c0_3, %c0_4] : memref<16x16xbf16, #tpu.memory_space<vmem>>, vector<16x16xbf16>
    %cst = arith.constant dense<0.000000e+00> : vector<64x16xf32>
    %4 = tpu.matmul %2, %3, %cst {dimension_numbers = #tpu.dot_dimension_numbers<[1], [0], [0], [1], [0, 0, 1, 1], [], []>} : vector<64x16xbf16>, vector<16x16xbf16>, vector<64x16xf32> -> vector<64x16xf32>
    %c0_5 = arith.constant 0 : index
    %c0_6 = arith.constant 0 : index
    %5 = vector.load %arg3[%c0_5, %c0_6] : memref<1x16xf32, #tpu.memory_space<vmem>>, vector<1x16xf32>
    %6 = vector.broadcast %5 : vector<1x16xf32> to vector<64x16xf32>
    %7 = arith.addf %4, %6 : vector<64x16xf32>
    %cst_7 = arith.constant 0.000000e+00 : bf16
    %8 = vector.broadcast %cst_7 : bf16 to vector<10x10x16xbf16>
    %c0_8 = arith.constant 0 : index
    %c0_9 = arith.constant 0 : index
    %c0_10 = arith.constant 0 : index
    %9 = vector.load %arg11[%c0_8, %c0_9, %c0_10] : memref<10x10x16xbf16, #tpu.memory_space<vmem>>, vector<10x10x16xbf16>
    tpu.vector_store %arg11[%c0_8, %c0_9, %c0_10], %8 {strides = array<i32>} : memref<10x10x16xbf16, #tpu.memory_space<vmem>>, vector<10x10x16xbf16>,
    %10 = vector.shape_cast %7 : vector<64x16xf32> to vector<8x8x16xf32>
    %11 = arith.truncf %10 : vector<8x8x16xf32> to vector<8x8x16xbf16>
    %c1 = arith.constant 1 : index
    %c1_11 = arith.constant 1 : index
    %c0_12 = arith.constant 0 : index
    %12 = vector.load %arg11[%c1, %c1_11, %c0_12] : memref<10x10x16xbf16, #tpu.memory_space<vmem>>, vector<8x8x16xbf16>
    tpu.vector_store %arg11[%c1, %c1_11, %c0_12], %11 {strides = array<i32>} : memref<10x10x16xbf16, #tpu.memory_space<vmem>>, vector<8x8x16xbf16>,
    %cst_13 = arith.constant 0.000000e+00 : f32
    %13 = vector.broadcast %cst_13 : f32 to vector<64x16xf32>
    %c0_14 = arith.constant 0 : index
    %c0_15 = arith.constant 0 : index
    %c0_16 = arith.constant 0 : index
    %14 = vector.load %arg11[%c0_14, %c0_15, %c0_16] : memref<10x10x16xbf16, #tpu.memory_space<vmem>>, vector<8x8x16xbf16>
    %15 = vector.shape_cast %14 : vector<8x8x16xbf16> to vector<64x16xbf16>
    %c0_17 = arith.constant 0 : index
    %c0_18 = arith.constant 0 : index
    %c0_19 = arith.constant 0 : index
    %c0_20 = arith.constant 0 : index
    %16 = vector.load %arg4[%c0_17, %c0_18, %c0_19, %c0_20] : memref<3x3x16x16xbf16, #tpu.memory_space<vmem>>, vector<1x1x16x16xbf16>
    %17 = vector.shape_cast %16 : vector<1x1x16x16xbf16> to vector<16x16xbf16>
    %cst_21 = arith.constant dense<0.000000e+00> : vector<64x16xf32>
    %18 = tpu.matmul %15, %17, %cst_21 {dimension_numbers = #tpu.dot_dimension_numbers<[1], [0], [0], [1], [0, 0, 1, 1], [], []>} : vector<64x16xbf16>, vector<16x16xbf16>, vector<64x16xf32> -> vector<64x16xf32>
    %19 = arith.addf %13, %18 : vector<64x16xf32>
    %c0_22 = arith.constant 0 : index
    %c1_23 = arith.constant 1 : index
    %c0_24 = arith.constant 0 : index
    %20 = vector.load %arg11[%c0_22, %c1_23, %c0_24] : memref<10x10x16xbf16, #tpu.memory_space<vmem>>, vector<8x8x16xbf16>
    %21 = vector.shape_cast %20 : vector<8x8x16xbf16> to vector<64x16xbf16>
    %c0_25 = arith.constant 0 : index
    %c1_26 = arith.constant 1 : index
    %c0_27 = arith.constant 0 : index
    %c0_28 = arith.constant 0 : index
    %22 = vector.load %arg4[%c0_25, %c1_26, %c0_27, %c0_28] : memref<3x3x16x16xbf16, #tpu.memory_space<vmem>>, vector<1x1x16x16xbf16>
    %23 = vector.shape_cast %22 : vector<1x1x16x16xbf16> to vector<16x16xbf16>
    %cst_29 = arith.constant dense<0.000000e+00> : vector<64x16xf32>
    %24 = tpu.matmul %21, %23, %cst_29 {dimension_numbers = #tpu.dot_dimension_numbers<[1], [0], [0], [1], [0, 0, 1, 1], [], []>} : vector<64x16xbf16>, vector<16x16xbf16>, vector<64x16xf32> -> vector<64x16xf32>
    %25 = arith.addf %19, %24 : vector<64x16xf32>
    %c0_30 = arith.constant 0 : index
    %c2 = arith.constant 2 : index
    %c0_31 = arith.constant 0 : index
    %26 = vector.load %arg11[%c0_30, %c2, %c0_31] : memref<10x10x16xbf16, #tpu.memory_space<vmem>>, vector<8x8x16xbf16>
    %27 = vector.shape_cast %26 : vector<8x8x16xbf16> to vector<64x16xbf16>
    %c0_32 = arith.constant 0 : index
    %c2_33 = arith.constant 2 : index
    %c0_34 = arith.constant 0 : index
    %c0_35 = arith.constant 0 : index
    %28 = vector.load %arg4[%c0_32, %c2_33, %c0_34, %c0_35] : memref<3x3x16x16xbf16, #tpu.memory_space<vmem>>, vector<1x1x16x16xbf16>
    %29 = vector.shape_cast %28 : vector<1x1x16x16xbf16> to vector<16x16xbf16>
    %cst_36 = arith.constant dense<0.000000e+00> : vector<64x16xf32>
    %30 = tpu.matmul %27, %29, %cst_36 {dimension_numbers = #tpu.dot_dimension_numbers<[1], [0], [0], [1], [0, 0, 1, 1], [], []>} : vector<64x16xbf16>, vector<16x16xbf16>, vector<64x16xf32> -> vector<64x16xf32>
    %31 = arith.addf %25, %30 : vector<64x16xf32>
    %c1_37 = arith.constant 1 : index
    %c0_38 = arith.constant 0 : index
    %c0_39 = arith.constant 0 : index
    %32 = vector.load %arg11[%c1_37, %c0_38, %c0_39] : memref<10x10x16xbf16, #tpu.memory_space<vmem>>, vector<8x8x16xbf16>
    %33 = vector.shape_cast %32 : vector<8x8x16xbf16> to vector<64x16xbf16>
    %c1_40 = arith.constant 1 : index
    %c0_41 = arith.constant 0 : index
    %c0_42 = arith.constant 0 : index
    %c0_43 = arith.constant 0 : index
    %34 = vector.load %arg4[%c1_40, %c0_41, %c0_42, %c0_43] : memref<3x3x16x16xbf16, #tpu.memory_space<vmem>>, vector<1x1x16x16xbf16>
    %35 = vector.shape_cast %34 : vector<1x1x16x16xbf16> to vector<16x16xbf16>
    %cst_44 = arith.constant dense<0.000000e+00> : vector<64x16xf32>
    %36 = tpu.matmul %33, %35, %cst_44 {dimension_numbers = #tpu.dot_dimension_numbers<[1], [0], [0], [1], [0, 0, 1, 1], [], []>} : vector<64x16xbf16>, vector<16x16xbf16>, vector<64x16xf32> -> vector<64x16xf32>
    %37 = arith.addf %31, %36 : vector<64x16xf32>
    %c1_45 = arith.constant 1 : index
    %c1_46 = arith.constant 1 : index
    %c0_47 = arith.constant 0 : index
    %38 = vector.load %arg11[%c1_45, %c1_46, %c0_47] : memref<10x10x16xbf16, #tpu.memory_space<vmem>>, vector<8x8x16xbf16>
    %39 = vector.shape_cast %38 : vector<8x8x16xbf16> to vector<64x16xbf16>
    %c1_48 = arith.constant 1 : index
    %c1_49 = arith.constant 1 : index
    %c0_50 = arith.constant 0 : index
    %c0_51 = arith.constant 0 : index
    %40 = vector.load %arg4[%c1_48, %c1_49, %c0_50, %c0_51] : memref<3x3x16x16xbf16, #tpu.memory_space<vmem>>, vector<1x1x16x16xbf16>
    %41 = vector.shape_cast %40 : vector<1x1x16x16xbf16> to vector<16x16xbf16>
    %cst_52 = arith.constant dense<0.000000e+00> : vector<64x16xf32>
    %42 = tpu.matmul %39, %41, %cst_52 {dimension_numbers = #tpu.dot_dimension_numbers<[1], [0], [0], [1], [0, 0, 1, 1], [], []>} : vector<64x16xbf16>, vector<16x16xbf16>, vector<64x16xf32> -> vector<64x16xf32>
    %43 = arith.addf %37, %42 : vector<64x16xf32>
    %c1_53 = arith.constant 1 : index
    %c2_54 = arith.constant 2 : index
    %c0_55 = arith.constant 0 : index
    %44 = vector.load %arg11[%c1_53, %c2_54, %c0_55] : memref<10x10x16xbf16, #tpu.memory_space<vmem>>, vector<8x8x16xbf16>
    %45 = vector.shape_cast %44 : vector<8x8x16xbf16> to vector<64x16xbf16>
    %c1_56 = arith.constant 1 : index
    %c2_57 = arith.constant 2 : index
    %c0_58 = arith.constant 0 : index
    %c0_59 = arith.constant 0 : index
    %46 = vector.load %arg4[%c1_56, %c2_57, %c0_58, %c0_59] : memref<3x3x16x16xbf16, #tpu.memory_space<vmem>>, vector<1x1x16x16xbf16>
    %47 = vector.shape_cast %46 : vector<1x1x16x16xbf16> to vector<16x16xbf16>
    %cst_60 = arith.constant dense<0.000000e+00> : vector<64x16xf32>
    %48 = tpu.matmul %45, %47, %cst_60 {dimension_numbers = #tpu.dot_dimension_numbers<[1], [0], [0], [1], [0, 0, 1, 1], [], []>} : vector<64x16xbf16>, vector<16x16xbf16>, vector<64x16xf32> -> vector<64x16xf32>
    %49 = arith.addf %43, %48 : vector<64x16xf32>
    %c0_61 = arith.constant 0 : index
    %c0_62 = arith.constant 0 : index
    %50 = vector.load %arg5[%c0_61, %c0_62] : memref<1x16xf32, #tpu.memory_space<vmem>>, vector<1x16xf32>
    %51 = vector.broadcast %50 : vector<1x16xf32> to vector<64x16xf32>
    %52 = arith.addf %49, %51 : vector<64x16xf32>
    %53 = arith.addf %52, %1 : vector<64x16xf32>
    %cst_63 = arith.constant 0.707106769 : f32
    %54 = vector.broadcast %cst_63 : f32 to vector<64x16xf32>
    %55 = arith.mulf %54, %53 : vector<64x16xf32>
    %56 = arith.truncf %55 : vector<64x16xf32> to vector<64x16xbf16>
    %c0_64 = arith.constant 0 : index
    %c0_65 = arith.constant 0 : index
    %57 = vector.load %arg6[%c0_64, %c0_65] : memref<16x64xbf16, #tpu.memory_space<vmem>>, vector<16x64xbf16>
    %cst_66 = arith.constant dense<0.000000e+00> : vector<64x64xf32>
    %58 = tpu.matmul %56, %57, %cst_66 {dimension_numbers = #tpu.dot_dimension_numbers<[1], [0], [0], [1], [0, 0, 1, 1], [], []>} : vector<64x16xbf16>, vector<16x64xbf16>, vector<64x64xf32> -> vector<64x64xf32>
    %c0_67 = arith.constant 0 : index
    %c0_68 = arith.constant 0 : index
    %59 = vector.load %arg7[%c0_67, %c0_68] : memref<1x64xf32, #tpu.memory_space<vmem>>, vector<1x64xf32>
    %60 = vector.broadcast %59 : vector<1x64xf32> to vector<64x64xf32>
    %61 = arith.addf %58, %60 : vector<64x64xf32>
    %cst_69 = arith.constant 0.000000e+00 : f32
    %62 = vector.broadcast %cst_69 : f32 to vector<64x64xf32>
    %63 = arith.maximumf %61, %62 : vector<64x64xf32>
    %64 = arith.truncf %63 : vector<64x64xf32> to vector<64x64xbf16>
    %c0_70 = arith.constant 0 : index
    %c0_71 = arith.constant 0 : index
    %65 = vector.load %arg8[%c0_70, %c0_71] : memref<64x16xbf16, #tpu.memory_space<vmem>>, vector<64x16xbf16>
    %cst_72 = arith.constant dense<0.000000e+00> : vector<64x16xf32>
    %66 = tpu.matmul %64, %65, %cst_72 {dimension_numbers = #tpu.dot_dimension_numbers<[1], [0], [0], [1], [0, 0, 1, 1], [], []>} : vector<64x64xbf16>, vector<64x16xbf16>, vector<64x16xf32> -> vector<64x16xf32>
    %c0_73 = arith.constant 0 : index
    %c0_74 = arith.constant 0 : index
    %67 = vector.load %arg9[%c0_73, %c0_74] : memref<1x16xf32, #tpu.memory_space<vmem>>, vector<1x16xf32>
    %68 = vector.broadcast %67 : vector<1x16xf32> to vector<64x16xf32>
    %69 = arith.addf %66, %68 : vector<64x16xf32>
    %70 = arith.addf %69, %55 : vector<64x16xf32>
    %cst_75 = arith.constant 0.707106769 : f32
    %71 = vector.broadcast %cst_75 : f32 to vector<64x16xf32>
    %72 = arith.mulf %71, %70 : vector<64x16xf32>
    %73 = vector.shape_cast %72 : vector<64x16xf32> to vector<1x8x8x16xf32>
    %c0_76 = arith.constant 0 : index
    %c0_77 = arith.constant 0 : index
    %c0_78 = arith.constant 0 : index
    %c0_79 = arith.constant 0 : index
    %74 = vector.load %arg10[%c0_76, %c0_77, %c0_78, %c0_79] : memref<1x8x8x16xf32, #tpu.memory_space<vmem>>, vector<1x8x8x16xf32>
    tpu.vector_store %arg10[%c0_76, %c0_77, %c0_78, %c0_79], %73 {strides = array<i32>} : memref<1x8x8x16xf32, #tpu.memory_space<vmem>>, vector<1x8x8x16xf32>,
    return
  }
  func.func @transform_0(%arg0: i32) -> (i32, i32, i32, i32) {
    %c0_i32 = arith.constant 0 : i32
    %c0_i32_0 = arith.constant 0 : i32
    %c0_i32_1 = arith.constant 0 : i32
    %c0_i32_2 = arith.constant 0 : i32
    return %arg0, %c0_i32, %c0_i32_0, %c0_i32_1 : i32, i32, i32, i32
  }
  func.func @transform_1(%arg0: i32) -> (i32, i32) {
    %c0_i32 = arith.constant 0 : i32
    %c0_i32_0 = arith.constant 0 : i32
    %c0_i32_1 = arith.constant 0 : i32
    return %c0_i32, %c0_i32_0 : i32, i32
  }
  func.func @transform_2(%arg0: i32) -> (i32, i32) {
    %c0_i32 = arith.constant 0 : i32
    %c0_i32_0 = arith.constant 0 : i32
    %c0_i32_1 = arith.constant 0 : i32
    return %c0_i32, %c0_i32_0 : i32, i32
  }
  func.func @transform_3(%arg0: i32) -> (i32, i32, i32, i32) {
    %c0_i32 = arith.constant 0 : i32
    %c0_i32_0 = arith.constant 0 : i32
    %c0_i32_1 = arith.constant 0 : i32
    %c0_i32_2 = arith.constant 0 : i32
    %c0_i32_3 = arith.constant 0 : i32
    return %c0_i32, %c0_i32_0, %c0_i32_1, %c0_i32_2 : i32, i32, i32, i32
  }
  func.func @transform_4(%arg0: i32) -> (i32, i32) {
    %c0_i32 = arith.constant 0 : i32
    %c0_i32_0 = arith.constant 0 : i32
    %c0_i32_1 = arith.constant 0 : i32
    return %c0_i32, %c0_i32_0 : i32, i32
  }
  func.func @transform_5(%arg0: i32) -> (i32, i32) {
    %c0_i32 = arith.constant 0 : i32
    %c0_i32_0 = arith.constant 0 : i32
    %c0_i32_1 = arith.constant 0 : i32
    return %c0_i32, %c0_i32_0 : i32, i32
  }
  func.func @transform_6(%arg0: i32) -> (i32, i32) {
    %c0_i32 = arith.constant 0 : i32
    %c0_i32_0 = arith.constant 0 : i32
    %c0_i32_1 = arith.constant 0 : i32
    return %c0_i32, %c0_i32_0 : i32, i32
  }
  func.func @transform_7(%arg0: i32) -> (i32, i32) {
    %c0_i32 = arith.constant 0 : i32
    %c0_i32_0 = arith.constant 0 : i32
    %c0_i32_1 = arith.constant 0 : i32
    return %c0_i32, %c0_i32_0 : i32, i32
  }
  func.func @transform_8(%arg0: i32) -> (i32, i32) {
    %c0_i32 = arith.constant 0 : i32
    %c0_i32_0 = arith.constant 0 : i32
    %c0_i32_1 = arith.constant 0 : i32
    return %c0_i32, %c0_i32_0 : i32, i32
  }
  func.func @transform_9(%arg0: i32) -> (i32, i32, i32, i32) {
    %c0_i32 = arith.constant 0 : i32
    %c0_i32_0 = arith.constant 0 : i32
    %c0_i32_1 = arith.constant 0 : i32
    %c0_i32_2 = arith.constant 0 : i32
    return %arg0, %c0_i32, %c0_i32_0, %c0_i32_1 : i32, i32, i32, i32
  }
}

</mosaic_0001>

<llo_original>
// kernel: tpu_custom_call.1
$region0: #{tpu_custom_call.1}
  #allocation0 [shape = 'u32[]', space=smem, size = 0x4, offset = 0x4, fixed_abs, tag = 'smem constant byte address 0x4 - core index']
  #allocation1 [shape = 'u32[144,128]{1,0:T(1,128)}', space=vmem, size = 0x12000, scoped, tag = 'internal scratch']
  #allocation2 [shape = 'bf16[10,10,16]{2,1,0:T(8,128)(2,1)}', space=vmem, size = 0xa000, scoped, tag = 'scratch operand']
  %s0 = inlined_call_operand.hbm [shape: f32[2,8,8,16], index: 0, kind: input, shape index: {}]
  %s1 = inlined_call_operand.vmem [shape: bf16[16,16], index: 1, kind: input, shape index: {}]
  %s2 = inlined_call_operand.vmem [shape: f32[1,16], index: 2, kind: input, shape index: {}]
  %s3 = inlined_call_operand.hbm [shape: bf16[3,3,16,16], index: 3, kind: input, shape index: {}]
  %s4 = inlined_call_operand.vmem [shape: f32[1,16], index: 4, kind: input, shape index: {}]
  %s5 = inlined_call_operand.vmem [shape: bf16[16,64], index: 5, kind: input, shape index: {}]
  %s6 = inlined_call_operand.vmem [shape: f32[1,64], index: 6, kind: input, shape index: {}]
  %s7 = inlined_call_operand.vmem [shape: bf16[64,16], index: 7, kind: input, shape index: {}]
  %s8 = inlined_call_operand.vmem [shape: f32[1,16], index: 8, kind: input, shape index: {}]
  %s9 = inlined_call_operand.hbm [shape: f32[2,8,8,16], index: 9, kind: output, shape index: {}]
  %s10 = sld [smem:[#allocation0]]
  $region77: #{tpu_custom_call.1} parent=0
    _
  %s12 = ssub.s32 1, %s10
  %s13 = scalar_select 0, %s12, %s10
  $region1: #{tpu_custom_call.1} parent=0
    #allocation3 [shape = 'u8[65536]{0}', space=vmem, size = 0x10000, scoped, tag = 'input window, operand 0']
    #allocation4 [shape = 's32[2]{0}', space=sflag, size = 0x8, scoped, tag = 'scoped memory for tpu_custom_call.1']
    #allocation5 [shape = 's32[2]{0}', space=sflag, size = 0x8, scoped, tag = 'scoped memory for tpu_custom_call.1']
    #allocation6 [shape = 'u8[36864]{0}', space=vmem, size = 0x9000, scoped, tag = 'input window, operand 3, single buffered']
    #allocation7 [shape = 's32[1]{0}', space=sflag, size = 0x4, scoped, tag = 'scoped memory for tpu_custom_call.1']
    #allocation8 [shape = 'u8[65536]{0}', space=vmem, size = 0x10000, scoped, tag = 'output window, operand 0']
    %14 = vsyncpa [#allocation4], 0
    %s15 = scalar_lea.sflag [#allocation4], 1
    %16 = vsyncpa %s15, 0
    %17 = vsyncpa [#allocation7], 0
    %18 = vsyncpa [#allocation5], 0
    %s19 = scalar_lea.sflag [#allocation5], 1
    %20 = vsyncpa %s19, 0
    loop: start=0, step=1, limit=4
    $region2: #{tpu_custom_call.1} parent=1 // loop_pre_header
      _
    $region3: #{tpu_custom_call.1} parent=1 // loop_header
      %s22 = sphi 0, %s26
      %p23 = scmp.ge.s32.totalorder %s22, 4
      %s32 = sphi 0, %s34
      %s35 = sphi 0, %s32
      %s36 = sphi 0, %s35
      %s52 = sphi 0, %s36
      %s56 = sphi 0, %s56
      %s58 = sphi 0, %s56
      %s59 = sphi 0, %s58
      %s73 = sphi 0, %s59
      %s77 = sphi 0, %s77
      %s79 = sphi 0, %s77
      %s80 = sphi 0, %s79
      %s94 = sphi 0, %s80
      %s98 = sphi 0, %s98
      %s100 = sphi 0, %s98
      %s101 = sphi 0, %s100
      %s115 = sphi 0, %s101
      %s119 = sphi 0, %s119
      %s121 = sphi 0, %s119
      %s122 = sphi 0, %s121
      %s136 = sphi 0, %s122
      %s140 = sphi 0, %s140
      %s142 = sphi 0, %s140
      %s143 = sphi 0, %s142
      %s157 = sphi 0, %s143
      %s161 = sphi 0, %s161
      %s163 = sphi 0, %s161
      %s164 = sphi 0, %s163
      %s178 = sphi 0, %s164
      %s182 = sphi 0, %s182
      %s184 = sphi 0, %s182
      %s185 = sphi 0, %s184
      %s199 = sphi 0, %s185
      %s203 = sphi 0, %s203
      %s205 = sphi 0, %s203
      %s206 = sphi 0, %s205
      %s220 = sphi 0, %s206
      %s226 = sphi 0, %s228
      %s229 = sphi 0, %s226
      %s230 = sphi 0, %s229
      %s246 = sphi 0, %s230
    $region4: #{tpu_custom_call.1} parent=1 // loop_header_branch
      %25 = sbr.rel (%p23) target = $region8
    $region5: #{tpu_custom_call.1} parent=1 // loop_body
      %s27 = ssub.s32 %s22, 1
      %s28 = ssub.s32 %s22, 2
      %s29 = sadd.s32 %s22, 1
      %s30 = ssub.s32 %s22, %s29
      %p31 = scmp.eq.s32.totalorder %s30, 0
      %s33 = sadd.s32 %s32, 1
      %s34 = scalar_select %p31, %s32, %s33
      %p37 = pneg %p31
      %p38 = scmp.eq.s32.totalorder %s22, 1
      %p39 = por %p37, %p38
      %p40 = scmp.ne.s32.totalorder %s32, %s35
      %p41 = scmp.eq.s32.totalorder %s22, 0
      %p42 = por %p40, %p41
      %p43 = scmp.ne.s32.totalorder %s32, %s35
      %p44 = scmp.eq.s32.totalorder %s27, 1
      %p45 = por %p43, %p44
      %p46 = scmp.ne.s32.totalorder %s35, %s36
      %p47 = scmp.eq.s32.totalorder %s27, 0
      %p48 = por %p46, %p47
      %p49 = scmp.ne.s32.totalorder %s35, %s36
      %p50 = scmp.eq.s32.totalorder %s28, 1
      %p51 = por %p49, %p50
      %p53 = scmp.ne.s32.totalorder %s36, %s52
      %p54 = scmp.eq.s32.totalorder %s28, 0
      %p55 = por %p53, %p54
      %s57 = sadd.s32 %s56, 1
      %p60 = scmp.eq.s32.totalorder %s22, 1
      %p61 = scmp.ne.s32.totalorder %s56, %s58
      %p62 = scmp.eq.s32.totalorder %s22, 0
      %p63 = por %p61, %p62
      %p64 = scmp.ne.s32.totalorder %s56, %s58
      %p65 = scmp.eq.s32.totalorder %s27, 1
      %p66 = por %p64, %p65
      %p67 = scmp.ne.s32.totalorder %s58, %s59
      %p68 = scmp.eq.s32.totalorder %s27, 0
      %p69 = por %p67, %p68
      %p70 = scmp.ne.s32.totalorder %s58, %s59
      %p71 = scmp.eq.s32.totalorder %s28, 1
      %p72 = por %p70, %p71
      %p74 = scmp.ne.s32.totalorder %s59, %s73
      %p75 = scmp.eq.s32.totalorder %s28, 0
      %p76 = por %p74, %p75
      %s78 = sadd.s32 %s77, 1
      %p81 = scmp.eq.s32.totalorder %s22, 1
      %p82 = scmp.ne.s32.totalorder %s77, %s79
      %p83 = scmp.eq.s32.totalorder %s22, 0
      %p84 = por %p82, %p83
      %p85 = scmp.ne.s32.totalorder %s77, %s79
      %p86 = scmp.eq.s32.totalorder %s27, 1
      %p87 = por %p85, %p86
      %p88 = scmp.ne.s32.totalorder %s79, %s80
      %p89 = scmp.eq.s32.totalorder %s27, 0
      %p90 = por %p88, %p89
      %p91 = scmp.ne.s32.totalorder %s79, %s80
      %p92 = scmp.eq.s32.totalorder %s28, 1
      %p93 = por %p91, %p92
      %p95 = scmp.ne.s32.totalorder %s80, %s94
      %p96 = scmp.eq.s32.totalorder %s28, 0
      %p97 = por %p95, %p96
      %s99 = sadd.s32 %s98, 1
      %p102 = scmp.eq.s32.totalorder %s22, 1
      %p103 = scmp.ne.s32.totalorder %s98, %s100
      %p104 = scmp.eq.s32.totalorder %s22, 0
      %p105 = por %p103, %p104
      %p106 = scmp.ne.s32.totalorder %s98, %s100
      %p107 = scmp.eq.s32.totalorder %s27, 1
      %p108 = por %p106, %p107
      %p109 = scmp.ne.s32.totalorder %s100, %s101
      %p110 = scmp.eq.s32.totalorder %s27, 0
      %p111 = por %p109, %p110
      %p112 = scmp.ne.s32.totalorder %s100, %s101
      %p113 = scmp.eq.s32.totalorder %s28, 1
      %p114 = por %p112, %p113
      %p116 = scmp.ne.s32.totalorder %s101, %s115
      %p117 = scmp.eq.s32.totalorder %s28, 0
      %p118 = por %p116, %p117
      %s120 = sadd.s32 %s119, 1
      %p123 = scmp.eq.s32.totalorder %s22, 1
      %p124 = scmp.ne.s32.totalorder %s119, %s121
      %p125 = scmp.eq.s32.totalorder %s22, 0
      %p126 = por %p124, %p125
      %p127 = scmp.ne.s32.totalorder %s119, %s121
      %p128 = scmp.eq.s32.totalorder %s27, 1
      %p129 = por %p127, %p128
      %p130 = scmp.ne.s32.totalorder %s121, %s122
      %p131 = scmp.eq.s32.totalorder %s27, 0
      %p132 = por %p130, %p131
      %p133 = scmp.ne.s32.totalorder %s121, %s122
      %p134 = scmp.eq.s32.totalorder %s28, 1
      %p135 = por %p133, %p134
      %p137 = scmp.ne.s32.totalorder %s122, %s136
      %p138 = scmp.eq.s32.totalorder %s28, 0
      %p139 = por %p137, %p138
      %s141 = sadd.s32 %s140, 1
      %p144 = scmp.eq.s32.totalorder %s22, 1
      %p145 = scmp.ne.s32.totalorder %s140, %s142
      %p146 = scmp.eq.s32.totalorder %s22, 0
      %p147 = por %p145, %p146
      %p148 = scmp.ne.s32.totalorder %s140, %s142
      %p149 = scmp.eq.s32.totalorder %s27, 1
      %p150 = por %p148, %p149
      %p151 = scmp.ne.s32.totalorder %s142, %s143
      %p152 = scmp.eq.s32.totalorder %s27, 0
      %p153 = por %p151, %p152
      %p154 = scmp.ne.s32.totalorder %s142, %s143
      %p155 = scmp.eq.s32.totalorder %s28, 1
      %p156 = por %p154, %p155
      %p158 = scmp.ne.s32.totalorder %s143, %s157
      %p159 = scmp.eq.s32.totalorder %s28, 0
      %p160 = por %p158, %p159
      %s162 = sadd.s32 %s161, 1
      %p165 = scmp.eq.s32.totalorder %s22, 1
      %p166 = scmp.ne.s32.totalorder %s161, %s163
      %p167 = scmp.eq.s32.totalorder %s22, 0
      %p168 = por %p166, %p167
      %p169 = scmp.ne.s32.totalorder %s161, %s163
      %p170 = scmp.eq.s32.totalorder %s27, 1
      %p171 = por %p169, %p170
      %p172 = scmp.ne.s32.totalorder %s163, %s164
      %p173 = scmp.eq.s32.totalorder %s27, 0
      %p174 = por %p172, %p173
      %p175 = scmp.ne.s32.totalorder %s163, %s164
      %p176 = scmp.eq.s32.totalorder %s28, 1
      %p177 = por %p175, %p176
      %p179 = scmp.ne.s32.totalorder %s164, %s178
      %p180 = scmp.eq.s32.totalorder %s28, 0
      %p181 = por %p179, %p180
      %s183 = sadd.s32 %s182, 1
      %p186 = scmp.eq.s32.totalorder %s22, 1
      %p187 = scmp.ne.s32.totalorder %s182, %s184
      %p188 = scmp.eq.s32.totalorder %s22, 0
      %p189 = por %p187, %p188
      %p190 = scmp.ne.s32.totalorder %s182, %s184
      %p191 = scmp.eq.s32.totalorder %s27, 1
      %p192 = por %p190, %p191
      %p193 = scmp.ne.s32.totalorder %s184, %s185
      %p194 = scmp.eq.s32.totalorder %s27, 0
      %p195 = por %p193, %p194
      %p196 = scmp.ne.s32.totalorder %s184, %s185
      %p197 = scmp.eq.s32.totalorder %s28, 1
      %p198 = por %p196, %p197
      %p200 = scmp.ne.s32.totalorder %s185, %s199
      %p201 = scmp.eq.s32.totalorder %s28, 0
      %p202 = por %p200, %p201
      %s204 = sadd.s32 %s203, 1
      %p207 = scmp.eq.s32.totalorder %s22, 1
      %p208 = scmp.ne.s32.totalorder %s203, %s205
      %p209 = scmp.eq.s32.totalorder %s22, 0
      %p210 = por %p208, %p209
      %p211 = scmp.ne.s32.totalorder %s203, %s205
      %p212 = scmp.eq.s32.totalorder %s27, 1
      %p213 = por %p211, %p212
      %p214 = scmp.ne.s32.totalorder %s205, %s206
      %p215 = scmp.eq.s32.totalorder %s27, 0
      %p216 = por %p214, %p215
      %p217 = scmp.ne.s32.totalorder %s205, %s206
      %p218 = scmp.eq.s32.totalorder %s28, 1
      %p219 = por %p217, %p218
      %p221 = scmp.ne.s32.totalorder %s206, %s220
      %p222 = scmp.eq.s32.totalorder %s28, 0
      %p223 = por %p221, %p222
      %s224 = ssub.s32 %s22, %s29
      %p225 = scmp.eq.s32.totalorder %s224, 0
      %s227 = sadd.s32 %s226, 1
      %s228 = scalar_select %p225, %s226, %s227
      %p231 = pneg %p225
      %p232 = scmp.eq.s32.totalorder %s22, 1
      %p233 = por %p231, %p232
      %p234 = scmp.ne.s32.totalorder %s226, %s229
      %p235 = scmp.eq.s32.totalorder %s22, 0
      %p236 = por %p234, %p235
      %p237 = scmp.ne.s32.totalorder %s226, %s229
      %p238 = scmp.eq.s32.totalorder %s27, 1
      %p239 = por %p237, %p238
      %p240 = scmp.ne.s32.totalorder %s229, %s230
      %p241 = scmp.eq.s32.totalorder %s27, 0
      %p242 = por %p240, %p241
      %p243 = scmp.ne.s32.totalorder %s229, %s230
      %p244 = scmp.eq.s32.totalorder %s28, 1
      %p245 = por %p243, %p244
      %p247 = scmp.ne.s32.totalorder %s230, %s246
      %p248 = scmp.eq.s32.totalorder %s28, 0
      %p249 = por %p247, %p248
      %p250 = scmp.le.s32.totalorder 1, %s22
      %p251 = scmp.lt.s32.totalorder %s22, 3
      %p252 = pnand %p250, %p251
      %p253 = pneg %p252
      // Predicated region
      $region9: #{tpu_custom_call.1} parent=5 // pred_check
        _
      $region10: #{tpu_custom_call.1} parent=5 // pred_check_branch
        %255 = sbr.rel (%p252) target = $region12
      $region11: #{tpu_custom_call.1} parent=5 // pred_region
        %s256 = ssub.s32 %s22, 1
        // Predicated region
        $region13: #{tpu_custom_call.1} parent=11 // pred_check
          %p257 = pneg %p69
        $region14: #{tpu_custom_call.1} parent=11 // pred_check_branch
          %259 = sbr.rel (%p257) target = $region16
        $region15: #{tpu_custom_call.1} parent=11 // pred_region
          _
        $region16: #{tpu_custom_call.1} parent=11 // pred_fallthru
          _
        // Predicated region
        $region17: #{tpu_custom_call.1} parent=11 // pred_check
          %p260 = pneg %p90
        $region18: #{tpu_custom_call.1} parent=11 // pred_check_branch
          %262 = sbr.rel (%p260) target = $region20
        $region19: #{tpu_custom_call.1} parent=11 // pred_region
          _
        $region20: #{tpu_custom_call.1} parent=11 // pred_fallthru
          _
        // Predicated region
        $region21: #{tpu_custom_call.1} parent=11 // pred_check
          %p263 = pneg %p111
        $region22: #{tpu_custom_call.1} parent=11 // pred_check_branch
          %265 = sbr.rel (%p263) target = $region24
        $region23: #{tpu_custom_call.1} parent=11 // pred_region
          %s267 = ssub.s32 1152, 1152
          %268 = vsyncadd [#allocation7], %s267
          %s269 = sshll.u32 [#allocation6], 4
          %s270 = int_to_ptr.vmem [resolvable:$true] %s269
          %275 = dma.hbm_to_vmem [thread:$0]  %s3, 1152, %s270, [#allocation7], 64, 64, 4
        $region24: #{tpu_custom_call.1} parent=11 // pred_fallthru
          _
        // Predicated region
        $region25: #{tpu_custom_call.1} parent=11 // pred_check
          %p276 = pneg %p132
        $region26: #{tpu_custom_call.1} parent=11 // pred_check_branch
          %278 = sbr.rel (%p276) target = $region28
        $region27: #{tpu_custom_call.1} parent=11 // pred_region
          _
        $region28: #{tpu_custom_call.1} parent=11 // pred_fallthru
          _
        // Predicated region
        $region29: #{tpu_custom_call.1} parent=11 // pred_check
          %p279 = pneg %p153
        $region30: #{tpu_custom_call.1} parent=11 // pred_check_branch
          %281 = sbr.rel (%p279) target = $region32
        $region31: #{tpu_custom_call.1} parent=11 // pred_region
          _
        $region32: #{tpu_custom_call.1} parent=11 // pred_fallthru
          _
        // Predicated region
        $region33: #{tpu_custom_call.1} parent=11 // pred_check
          %p282 = pneg %p174
        $region34: #{tpu_custom_call.1} parent=11 // pred_check_branch
          %284 = sbr.rel (%p282) target = $region36
        $region35: #{tpu_custom_call.1} parent=11 // pred_region
          _
        $region36: #{tpu_custom_call.1} parent=11 // pred_fallthru
          _
        // Predicated region
        $region37: #{tpu_custom_call.1} parent=11 // pred_check
          %p285 = pneg %p195
        $region38: #{tpu_custom_call.1} parent=11 // pred_check_branch
          %287 = sbr.rel (%p285) target = $region40
        $region39: #{tpu_custom_call.1} parent=11 // pred_region
          _
        $region40: #{tpu_custom_call.1} parent=11 // pred_fallthru
          _
        // Predicated region
        $region41: #{tpu_custom_call.1} parent=11 // pred_check
          %p288 = pneg %p216
        $region42: #{tpu_custom_call.1} parent=11 // pred_check_branch
          %290 = sbr.rel (%p288) target = $region44
        $region43: #{tpu_custom_call.1} parent=11 // pred_region
          _
        $region44: #{tpu_custom_call.1} parent=11 // pred_fallthru
          _
      $region12: #{tpu_custom_call.1} parent=5 // pred_fallthru
        _
      %p291 = scmp.lt.s32.totalorder %s22, 2
      // Predicated region
      $region45: #{tpu_custom_call.1} parent=5 // pred_check
        %p292 = pneg %p291
      $region46: #{tpu_custom_call.1} parent=5 // pred_check_branch
        %294 = sbr.rel (%p292) target = $region48
      $region47: #{tpu_custom_call.1} parent=5 // pred_region
        // Predicated region
        $region49: #{tpu_custom_call.1} parent=47 // pred_check
          %p295 = pneg %p42
        $region50: #{tpu_custom_call.1} parent=47 // pred_check_branch
          %297 = sbr.rel (%p295) target = $region52
        $region51: #{tpu_custom_call.1} parent=47 // pred_region
          %s298 = sand.u32 %s32, 1
          %s299 = scalar_lea.sflag [#allocation4], %s298
          %s300 = sand.u32 %s32, 1
          %s301 = smul.addr %s300, 64
          %s302 = scalar_lea.vmem [#allocation3], %s301
          %s304 = ssub.s32 1024, 1024
          %305 = vsyncadd %s299, %s304
          %s306 = smul.addr %s22, 8
          %s307 = smul.addr %s306, 128
          %s308 = scalar_lea.hbm %s0, %s307
          %s309 = sshll.u32 %s302, 4
          %s310 = int_to_ptr.vmem [resolvable:$true] %s309
          %315 = dma.hbm_to_vmem [thread:$0]  %s308, 1024, %s310, %s299, 128, 128, 8
        $region52: #{tpu_custom_call.1} parent=47 // pred_fallthru
          _
      $region48: #{tpu_custom_call.1} parent=5 // pred_fallthru
        _
      %p316 = scmp.le.s32.totalorder 1, %s22
      %p317 = scmp.lt.s32.totalorder %s22, 3
      %p318 = pnand %p316, %p317
      %p319 = pneg %p318
      // Predicated region
      $region53: #{tpu_custom_call.1} parent=5 // pred_check
        _
      $region54: #{tpu_custom_call.1} parent=5 // pred_check_branch
        %321 = sbr.rel (%p318) target = $region56
      $region55: #{tpu_custom_call.1} parent=5 // pred_region
        %s322 = ssub.s32 %s22, 1
        %s323 = sand.u32 %s35, 1
        %s324 = scalar_lea.sflag [#allocation4], %s323
        %s325 = sand.u32 %s35, 1
        %s326 = smul.addr %s325, 64
        %s327 = scalar_lea.vmem [#allocation3], %s326
        // Predicated region
        $region57: #{tpu_custom_call.1} parent=55 // pred_check
          %p328 = pneg %p48
        $region58: #{tpu_custom_call.1} parent=55 // pred_check_branch
          %330 = sbr.rel (%p328) target = $region60
        $region59: #{tpu_custom_call.1} parent=55 // pred_region
          %331 = dma.done %s324, 1024
        $region60: #{tpu_custom_call.1} parent=55 // pred_fallthru
          _
        // Predicated region
        $region61: #{tpu_custom_call.1} parent=55 // pred_check
          %p332 = pneg %p111
        $region62: #{tpu_custom_call.1} parent=55 // pred_check_branch
          %334 = sbr.rel (%p332) target = $region64
        $region63: #{tpu_custom_call.1} parent=55 // pred_region
          %335 = dma.done [#allocation7], 1152
        $region64: #{tpu_custom_call.1} parent=55 // pred_fallthru
          _
        %s336 = sand.u32 %s35, 1
        %s337 = scalar_lea.sflag [#allocation4], %s336
        %s338 = sand.u32 %s35, 1
        %s339 = smul.addr %s338, 64
        %s340 = scalar_lea.vmem [#allocation3], %s339
        %p341 = pneg %p48
        %p342 = pneg %p45
        %p343 = pneg %p69
        %p344 = pneg %p66
        %p345 = pneg %p90
        %p346 = pneg %p87
        %p347 = pneg %p111
        %p348 = pneg %p108
        %p349 = pneg %p132
        %p350 = pneg %p129
        %p351 = pneg %p153
        %p352 = pneg %p150
        %p353 = pneg %p174
        %p354 = pneg %p171
        %p355 = pneg %p195
        %p356 = pneg %p192
        %p357 = pneg %p216
        %p358 = pneg %p213
        %p359 = pneg %p242
        %p360 = pneg %p239
        %s361 = sand.u32 %s229, 1
        %s362 = scalar_lea.sflag [#allocation5], %s361
        %s363 = sand.u32 %s229, 1
        %s364 = smul.addr %s363, 64
        %s365 = scalar_lea.vmem [#allocation8], %s364
        %v367 = vld [vmem:[%s327] sm:$0xff]
        %v368 = vld [vmem:[%s327 + $0x8] sm:$0xff]
        %v369 = vld [vmem:[%s327 + $0x10] sm:$0xff]
        %v370 = vld [vmem:[%s327 + $0x18] sm:$0xff]
        %v371 = vld [vmem:[%s327 + $0x20] sm:$0xff]
        %v372 = vld [vmem:[%s327 + $0x28] sm:$0xff]
        %v373 = vld [vmem:[%s327 + $0x30] sm:$0xff]
        %v374 = vld [vmem:[%s327 + $0x38] sm:$0xff]
        %v375 = vpack.c.bf16 %v368, %v367
        %v376 = vpack.c.bf16 %v370, %v369
        %v377 = vpack.c.bf16 %v372, %v371
        %v378 = vpack.c.bf16 %v374, %v373
        %v379 = vld [vmem:[%s1] sm:$0xf]
        %v380 = vld [vmem:[%s1 + $0x4] sm:$0xf]
        %v381 = vld [vmem:[%s2] sm:$0x1]
        %v383 = vlaneseq
        %v384 = vshrl.u32 %v383, 7
        %v385 = vsub.s32 0, %v384
        %v386 = vrot.slane %v381, %v385
        %v390 = vunpack.c.l.b16 %v379
        %v391 = vunpack.c.l.b16 %v380
        %v392 = vpack.c.b16 %v391, %v390
        %vm394 = vcmask 130048
        %v396 = vsel %vm394, %v375, 0
        %v399 = vsel %vm394, %v376, 0
        %v402 = vsel %vm394, %v377, 0
        %v405 = vsel %vm394, %v378, 0
        %407 = vmatprep.subr.bf16.mxu0 0
        %408 = vmatpush1.bf16.msra.mxu0 %v392
        %409 = vmatprep.subr.bf16.mxu0 0
        %410 = vmatpush1.bf16.msra.mxu0 0
        %411 = vmatprep.subr.bf16.mxu0 0
        %412 = vmatpush1.bf16.msra.mxu0 0
        %413 = vmatprep.subr.bf16.mxu0 0
        %414 = vmatpush1.bf16.msra.mxu0 0
        %415 = vmatprep.subr.bf16.mxu0 0
        %416 = vmatpush1.bf16.msra.mxu0 0
        %417 = vmatprep.subr.bf16.mxu0 0
        %418 = vmatpush1.bf16.msra.mxu0 0
        %419 = vmatprep.subr.bf16.mxu0 0
        %420 = vmatpush1.bf16.msra.mxu0 0
        %421 = vmatprep.subr.bf16.mxu0 0
        %422 = vmatpush1.bf16.msra.mxu0 0
        %423 = vmatprep.subr.bf16.mxu0 0
        %424 = vmatpush1.bf16.msra.mxu0 0
        %425 = vmatprep.subr.bf16.mxu0 0
        %426 = vmatpush1.bf16.msra.mxu0 0
        %427 = vmatprep.subr.bf16.mxu0 0
        %428 = vmatpush1.bf16.msra.mxu0 0
        %429 = vmatprep.subr.bf16.mxu0 0
        %430 = vmatpush1.bf16.msra.mxu0 0
        %431 = vmatprep.subr.bf16.mxu0 0
        %432 = vmatpush1.bf16.msra.mxu0 0
        %433 = vmatprep.subr.bf16.mxu0 0
        %434 = vmatpush1.bf16.msra.mxu0 0
        %435 = vmatprep.subr.bf16.mxu0 0
        %436 = vmatpush1.bf16.msra.mxu0 0
        %437 = vmatprep.subr.bf16.mxu0 0
        %438 = vmatpush1.bf16.msra.mxu0 0
        %439 = vmatprep.mubr.bf16.mxu0 0
        %440 = vmatmul.mubr.bf16.gmra.mrb[0].mxu0 %v396
        %v441 = vpop.f32.mrb[0].mxu0
        %v442 = vadd.f32 %v386, %v441
        %v443 = vpop.f32.mrb[0].mxu0
        %v444 = vpop.f32.mrb[0].mxu0
        %v445 = vadd.f32 %v386, %v444
        %v446 = vpop.f32.mrb[0].mxu0
        %447 = vmatprep.mubr.bf16.mxu0 0
        %448 = vmatmul.mubr.bf16.gmra.mrb[0].mxu0 %v399
        %v449 = vpop.f32.mrb[0].mxu0
        %v450 = vadd.f32 %v386, %v449
        %v451 = vpop.f32.mrb[0].mxu0
        %v452 = vpop.f32.mrb[0].mxu0
        %v453 = vadd.f32 %v386, %v452
        %v454 = vpop.f32.mrb[0].mxu0
        %455 = vmatprep.mubr.bf16.mxu0 0
        %456 = vmatmul.mubr.bf16.gmra.mrb[0].mxu0 %v402
        %v457 = vpop.f32.mrb[0].mxu0
        %v458 = vadd.f32 %v386, %v457
        %v459 = vpop.f32.mrb[0].mxu0
        %v460 = vpop.f32.mrb[0].mxu0
        %v461 = vadd.f32 %v386, %v460
        %v462 = vpop.f32.mrb[0].mxu0
        %463 = vmatprep.mubr.bf16.mxu0 0
        %464 = vmatmul.mubr.bf16.gmra.mrb[0].mxu0 %v405
        %v465 = vpop.f32.mrb[0].mxu0
        %v466 = vadd.f32 %v386, %v465
        %v467 = vpop.f32.mrb[0].mxu0
        %v468 = vpop.f32.mrb[0].mxu0
        %v469 = vadd.f32 %v386, %v468
        %v470 = vpop.f32.mrb[0].mxu0
        %471 = vdwg.mxu0
        %vm472 = vcmask 125952
        %473 = vst.msk [vmem:[#allocation2] sm:$0xf] %vm472, 0
        %vm474 = vcmask 122880
        %475 = vst.msk [vmem:[#allocation2 + $0x4] sm:$0x1] %vm474, 0
        %476 = vst.msk [vmem:[#allocation2 + $0x8] sm:$0xf] %vm472, 0
        %477 = vst.msk [vmem:[#allocation2 + $0xc] sm:$0x1] %vm474, 0
        %478 = vst.msk [vmem:[#allocation2 + $0x10] sm:$0xf] %vm472, 0
        %479 = vst.msk [vmem:[#allocation2 + $0x14] sm:$0x1] %vm474, 0
        %480 = vst.msk [vmem:[#allocation2 + $0x18] sm:$0xf] %vm472, 0
        %481 = vst.msk [vmem:[#allocation2 + $0x1c] sm:$0x1] %vm474, 0
        %482 = vst.msk [vmem:[#allocation2 + $0x20] sm:$0xf] %vm472, 0
        %483 = vst.msk [vmem:[#allocation2 + $0x24] sm:$0x1] %vm474, 0
        %484 = vst.msk [vmem:[#allocation2 + $0x28] sm:$0xf] %vm472, 0
        %485 = vst.msk [vmem:[#allocation2 + $0x2c] sm:$0x1] %vm474, 0
        %486 = vst.msk [vmem:[#allocation2 + $0x30] sm:$0xf] %vm472, 0
        %487 = vst.msk [vmem:[#allocation2 + $0x34] sm:$0x1] %vm474, 0
        %488 = vst.msk [vmem:[#allocation2 + $0x38] sm:$0xf] %vm472, 0
        %489 = vst.msk [vmem:[#allocation2 + $0x3c] sm:$0x1] %vm474, 0
        %490 = vst.msk [vmem:[#allocation2 + $0x40] sm:$0xf] %vm472, 0
        %491 = vst.msk [vmem:[#allocation2 + $0x44] sm:$0x1] %vm474, 0
        %492 = vst.msk [vmem:[#allocation2 + $0x48] sm:$0xf] %vm472, 0
        %493 = vst.msk [vmem:[#allocation2 + $0x4c] sm:$0x1] %vm474, 0
        %v494 = vpack.c.bf16 %v442, %v442
        %v495 = vpack.c.bf16 %v445, %v445
        %v496 = vpack.c.bf16 %v450, %v450
        %v497 = vpack.c.bf16 %v453, %v453
        %v498 = vpack.c.bf16 %v458, %v458
        %v499 = vpack.c.bf16 %v461, %v461
        %v500 = vpack.c.bf16 %v466, %v466
        %v501 = vpack.c.bf16 %v469, %v469
        %v510 = vunpack.c.l.b16 %v494
        %v511 = vunpack.c.l.b16 %v495
        %v512 = vunpack.c.l.b16 %v496
        %v513 = vunpack.c.l.b16 %v497
        %v514 = vunpack.c.l.b16 %v498
        %v515 = vunpack.c.l.b16 %v499
        %v516 = vunpack.c.l.b16 %v500
        %v517 = vunpack.c.l.b16 %v501
        %v518 = vpack.c.b16 %v510, %v510
        %v519 = vpack.c.b16 %v511, %v511
        %v520 = vpack.c.b16 %v512, %v512
        %v521 = vpack.c.b16 %v513, %v513
        %v522 = vpack.c.b16 %v514, %v514
        %v523 = vpack.c.b16 %v515, %v515
        %v524 = vpack.c.b16 %v516, %v516
        %v525 = vpack.c.b16 %v517, %v517
        %v527 = vshrl.u32 %v518, 16
        %v529 = vrot.slane %v527, 7
        %v530 = vshll.u32 %v518, 16
        %v532 = vor.u32 %v529, %v530
        %v533 = vrot.slane %v529, 4
        %v535 = vshrl.u32 %v519, 16
        %v537 = vrot.slane %v535, 7
        %v538 = vshll.u32 %v519, 16
        %v540 = vor.u32 %v537, %v538
        %v541 = vrot.slane %v537, 4
        %v543 = vshrl.u32 %v520, 16
        %v545 = vrot.slane %v543, 7
        %v546 = vshll.u32 %v520, 16
        %v548 = vor.u32 %v545, %v546
        %v549 = vrot.slane %v545, 4
        %v551 = vshrl.u32 %v521, 16
        %v553 = vrot.slane %v551, 7
        %v554 = vshll.u32 %v521, 16
        %v556 = vor.u32 %v553, %v554
        %v557 = vrot.slane %v553, 4
        %v559 = vshrl.u32 %v522, 16
        %v561 = vrot.slane %v559, 7
        %v562 = vshll.u32 %v522, 16
        %v564 = vor.u32 %v561, %v562
        %v565 = vrot.slane %v561, 4
        %v567 = vshrl.u32 %v523, 16
        %v569 = vrot.slane %v567, 7
        %v570 = vshll.u32 %v523, 16
        %v572 = vor.u32 %v569, %v570
        %v573 = vrot.slane %v569, 4
        %v575 = vshrl.u32 %v524, 16
        %v577 = vrot.slane %v575, 7
        %v578 = vshll.u32 %v524, 16
        %v580 = vor.u32 %v577, %v578
        %v581 = vrot.slane %v577, 4
        %v583 = vshrl.u32 %v525, 16
        %v585 = vrot.slane %v583, 7
        %v586 = vshll.u32 %v525, 16
        %v588 = vor.u32 %v585, %v586
        %v589 = vrot.slane %v585, 4
        %s606 = scalar_lea.vmem [#allocation2], 8
        %vm607 = vcmask 125952
        %vm608 = vsmask.f32 7938
        %vm609 = vmand %vm607, %vm608
        %v610 = vld [vmem:[%s606] sm:$0xf]
        %v611 = vsel %vm609, %v532, %v610
        %612 = vst [vmem:[%s606] sm:$0xf] %v611
        %vm613 = vcmask 122880
        %vm614 = vsmask.f32 256
        %vm615 = vmand %vm613, %vm614
        %v616 = vld [vmem:[%s606 + $0x4] sm:$0x1]
        %v617 = vsel %vm615, %v533, %v616
        %618 = vst [vmem:[%s606 + $0x4] sm:$0x1] %v617
        %v619 = vld [vmem:[%s606 + $0x8] sm:$0xf]
        %v620 = vsel %vm609, %v540, %v619
        %621 = vst [vmem:[%s606 + $0x8] sm:$0xf] %v620
        %v622 = vld [vmem:[%s606 + $0xc] sm:$0x1]
        %v623 = vsel %vm615, %v541, %v622
        %624 = vst [vmem:[%s606 + $0xc] sm:$0x1] %v623
        %v625 = vld [vmem:[%s606 + $0x10] sm:$0xf]
        %v626 = vsel %vm609, %v548, %v625
        %627 = vst [vmem:[%s606 + $0x10] sm:$0xf] %v626
        %v628 = vld [vmem:[%s606 + $0x14] sm:$0x1]
        %v629 = vsel %vm615, %v549, %v628
        %630 = vst [vmem:[%s606 + $0x14] sm:$0x1] %v629
        %v631 = vld [vmem:[%s606 + $0x18] sm:$0xf]
        %v632 = vsel %vm609, %v556, %v631
        %633 = vst [vmem:[%s606 + $0x18] sm:$0xf] %v632
        %v634 = vld [vmem:[%s606 + $0x1c] sm:$0x1]
        %v635 = vsel %vm615, %v557, %v634
        %636 = vst [vmem:[%s606 + $0x1c] sm:$0x1] %v635
        %v637 = vld [vmem:[%s606 + $0x20] sm:$0xf]
        %v638 = vsel %vm609, %v564, %v637
        %639 = vst [vmem:[%s606 + $0x20] sm:$0xf] %v638
        %v640 = vld [vmem:[%s606 + $0x24] sm:$0x1]
        %v641 = vsel %vm615, %v565, %v640
        %642 = vst [vmem:[%s606 + $0x24] sm:$0x1] %v641
        %v643 = vld [vmem:[%s606 + $0x28] sm:$0xf]
        %v644 = vsel %vm609, %v572, %v643
        %645 = vst [vmem:[%s606 + $0x28] sm:$0xf] %v644
        %v646 = vld [vmem:[%s606 + $0x2c] sm:$0x1]
        %v647 = vsel %vm615, %v573, %v646
        %648 = vst [vmem:[%s606 + $0x2c] sm:$0x1] %v647
        %v649 = vld [vmem:[%s606 + $0x30] sm:$0xf]
        %v650 = vsel %vm609, %v580, %v649
        %651 = vst [vmem:[%s606 + $0x30] sm:$0xf] %v650
        %v652 = vld [vmem:[%s606 + $0x34] sm:$0x1]
        %v653 = vsel %vm615, %v581, %v652
        %654 = vst [vmem:[%s606 + $0x34] sm:$0x1] %v653
        %v655 = vld [vmem:[%s606 + $0x38] sm:$0xf]
        %v656 = vsel %vm609, %v588, %v655
        %657 = vst [vmem:[%s606 + $0x38] sm:$0xf] %v656
        %v658 = vld [vmem:[%s606 + $0x3c] sm:$0x1]
        %v659 = vsel %vm615, %v589, %v658
        %660 = vst [vmem:[%s606 + $0x3c] sm:$0x1] %v659
        %v661 = vld [vmem:[#allocation2] sm:$0xf]
        %v662 = vld [vmem:[#allocation2 + $0x8] sm:$0xf]
        %v663 = vld [vmem:[#allocation2 + $0x10] sm:$0xf]
        %v664 = vld [vmem:[#allocation2 + $0x18] sm:$0xf]
        %v665 = vld [vmem:[#allocation2 + $0x20] sm:$0xf]
        %v666 = vld [vmem:[#allocation2 + $0x28] sm:$0xf]
        %v667 = vld [vmem:[#allocation2 + $0x30] sm:$0xf]
        %v668 = vld [vmem:[#allocation2 + $0x38] sm:$0xf]
        %v669 = vld [vmem:[#allocation6] sm:$0xf]
        %v670 = vld [vmem:[#allocation6 + $0x4] sm:$0xf]
        %v671 = vld [vmem:[#allocation2 + $0x4] sm:$0x1]
        %v672 = vld [vmem:[#allocation2 + $0xc] sm:$0x1]
        %v673 = vld [vmem:[#allocation2 + $0x14] sm:$0x1]
        %v674 = vld [vmem:[#allocation2 + $0x1c] sm:$0x1]
        %v675 = vld [vmem:[#allocation2 + $0x24] sm:$0x1]
        %v676 = vld [vmem:[#allocation2 + $0x2c] sm:$0x1]
        %v677 = vld [vmem:[#allocation2 + $0x34] sm:$0x1]
        %v678 = vld [vmem:[#allocation2 + $0x3c] sm:$0x1]
        %vm679 = vsmask.f32 3328
        %vm680 = vsmask.f32 7440
        %vm681 = vmor %vm679, %vm680
        %v683 = vshrl.u32 %v661, 16
        %v685 = vrot.slane %v683, 4
        %v686 = vshll.u32 %v661, 16
        %v688 = vrot.slane %v686, 5
        %v689 = vor.u32 %v685, %v688
        %v690 = vrot.slane %v689, 4
        %v692 = vshll.u32 %v671, 16
        %v694 = vrot.slane %v692, 5
        %v695 = vsel %vm681, %v690, %v694
        %v697 = vshrl.u32 %v662, 16
        %v699 = vrot.slane %v697, 4
        %v700 = vshll.u32 %v662, 16
        %v702 = vrot.slane %v700, 5
        %v703 = vor.u32 %v699, %v702
        %v704 = vrot.slane %v703, 4
        %v706 = vshll.u32 %v672, 16
        %v708 = vrot.slane %v706, 5
        %v709 = vsel %vm681, %v704, %v708
        %v711 = vshrl.u32 %v663, 16
        %v713 = vrot.slane %v711, 4
        %v714 = vshll.u32 %v663, 16
        %v716 = vrot.slane %v714, 5
        %v717 = vor.u32 %v713, %v716
        %v718 = vrot.slane %v717, 4
        %v720 = vshll.u32 %v673, 16
        %v722 = vrot.slane %v720, 5
        %v723 = vsel %vm681, %v718, %v722
        %v725 = vshrl.u32 %v664, 16
        %v727 = vrot.slane %v725, 4
        %v728 = vshll.u32 %v664, 16
        %v730 = vrot.slane %v728, 5
        %v731 = vor.u32 %v727, %v730
        %v732 = vrot.slane %v731, 4
        %v734 = vshll.u32 %v674, 16
        %v736 = vrot.slane %v734, 5
        %v737 = vsel %vm681, %v732, %v736
        %v739 = vshrl.u32 %v665, 16
        %v741 = vrot.slane %v739, 4
        %v742 = vshll.u32 %v665, 16
        %v744 = vrot.slane %v742, 5
        %v745 = vor.u32 %v741, %v744
        %v746 = vrot.slane %v745, 4
        %v748 = vshll.u32 %v675, 16
        %v750 = vrot.slane %v748, 5
        %v751 = vsel %vm681, %v746, %v750
        %v753 = vshrl.u32 %v666, 16
        %v755 = vrot.slane %v753, 4
        %v756 = vshll.u32 %v666, 16
        %v758 = vrot.slane %v756, 5
        %v759 = vor.u32 %v755, %v758
        %v760 = vrot.slane %v759, 4
        %v762 = vshll.u32 %v676, 16
        %v764 = vrot.slane %v762, 5
        %v765 = vsel %vm681, %v760, %v764
        %v767 = vshrl.u32 %v667, 16
        %v769 = vrot.slane %v767, 4
        %v770 = vshll.u32 %v667, 16
        %v772 = vrot.slane %v770, 5
        %v773 = vor.u32 %v769, %v772
        %v774 = vrot.slane %v773, 4
        %v776 = vshll.u32 %v677, 16
        %v778 = vrot.slane %v776, 5
        %v779 = vsel %vm681, %v774, %v778
        %v781 = vshrl.u32 %v668, 16
        %v783 = vrot.slane %v781, 4
        %v784 = vshll.u32 %v668, 16
        %v786 = vrot.slane %v784, 5
        %v787 = vor.u32 %v783, %v786
        %v788 = vrot.slane %v787, 4
        %v790 = vshll.u32 %v678, 16
        %v792 = vrot.slane %v790, 5
        %v793 = vsel %vm681, %v788, %v792
        %s794 = scalar_lea.vmem [#allocation6], 8
        %v795 = vld [vmem:[%s794] sm:$0xf]
        %v796 = vld [vmem:[%s794 + $0x4] sm:$0xf]
        %v797 = vunpack.c.l.b16 %v695
        %v798 = vunpack.c.l.b16 %v709
        %v799 = vunpack.c.l.b16 %v723
        %v800 = vunpack.c.l.b16 %v737
        %v801 = vunpack.c.l.b16 %v751
        %v802 = vunpack.c.l.b16 %v765
        %v803 = vunpack.c.l.b16 %v779
        %v804 = vunpack.c.l.b16 %v793
        %v805 = vpack.c.b16 %v798, %v797
        %v806 = vpack.c.b16 %v800, %v799
        %v807 = vpack.c.b16 %v802, %v801
        %v808 = vpack.c.b16 %v804, %v803
        %v811 = vunpack.c.l.b16 %v795
        %v812 = vunpack.c.l.b16 %v796
        %v813 = vpack.c.b16 %v812, %v811
        %v816 = vsel %vm394, %v805, 0
        %v819 = vsel %vm394, %v806, 0
        %v822 = vsel %vm394, %v807, 0
        %v825 = vsel %vm394, %v808, 0
        %827 = vmatprep.subr.bf16.mxu0 0
        %828 = vmatpush1.bf16.msra.mxu0 %v813
        %829 = vmatprep.subr.bf16.mxu0 0
        %830 = vmatpush1.bf16.msra.mxu0 0
        %831 = vmatprep.subr.bf16.mxu0 0
        %832 = vmatpush1.bf16.msra.mxu0 0
        %833 = vmatprep.subr.bf16.mxu0 0
        %834 = vmatpush1.bf16.msra.mxu0 0
        %835 = vmatprep.subr.bf16.mxu0 0
        %836 = vmatpush1.bf16.msra.mxu0 0
        %837 = vmatprep.subr.bf16.mxu0 0
        %838 = vmatpush1.bf16.msra.mxu0 0
        %839 = vmatprep.subr.bf16.mxu0 0
        %840 = vmatpush1.bf16.msra.mxu0 0
        %841 = vmatprep.subr.bf16.mxu0 0
        %842 = vmatpush1.bf16.msra.mxu0 0
        %843 = vmatprep.subr.bf16.mxu0 0
        %844 = vmatpush1.bf16.msra.mxu0 0
        %845 = vmatprep.subr.bf16.mxu0 0
        %846 = vmatpush1.bf16.msra.mxu0 0
        %847 = vmatprep.subr.bf16.mxu0 0
        %848 = vmatpush1.bf16.msra.mxu0 0
        %849 = vmatprep.subr.bf16.mxu0 0
        %850 = vmatpush1.bf16.msra.mxu0 0
        %851 = vmatprep.subr.bf16.mxu0 0
        %852 = vmatpush1.bf16.msra.mxu0 0
        %853 = vmatprep.subr.bf16.mxu0 0
        %854 = vmatpush1.bf16.msra.mxu0 0
        %855 = vmatprep.subr.bf16.mxu0 0
        %856 = vmatpush1.bf16.msra.mxu0 0
        %857 = vmatprep.subr.bf16.mxu0 0
        %858 = vmatpush1.bf16.msra.mxu0 0
        %859 = vmatprep.mubr.bf16.mxu0 0
        %860 = vmatmul.mubr.bf16.gmra.mrb[0].mxu0 %v816
        %v861 = vpop.f32.mrb[0].mxu0
        %v862 = vadd.f32 0.0, %v861
        %v863 = vpop.f32.mrb[0].mxu0
        %v864 = vpop.f32.mrb[0].mxu0
        %v865 = vadd.f32 0.0, %v864
        %v866 = vpop.f32.mrb[0].mxu0
        %867 = vmatprep.mubr.bf16.mxu0 0
        %868 = vmatmul.mubr.bf16.gmra.mrb[0].mxu0 %v819
        %v869 = vpop.f32.mrb[0].mxu0
        %v870 = vadd.f32 0.0, %v869
        %v871 = vpop.f32.mrb[0].mxu0
        %v872 = vpop.f32.mrb[0].mxu0
        %v873 = vadd.f32 0.0, %v872
        %v874 = vpop.f32.mrb[0].mxu0
        %875 = vmatprep.mubr.bf16.mxu0 0
        %876 = vmatmul.mubr.bf16.gmra.mrb[0].mxu0 %v822
        %v877 = vpop.f32.mrb[0].mxu0
        %v878 = vadd.f32 0.0, %v877
        %v879 = vpop.f32.mrb[0].mxu0
        %v880 = vpop.f32.mrb[0].mxu0
        %v881 = vadd.f32 0.0, %v880
        %v882 = vpop.f32.mrb[0].mxu0
        %883 = vmatprep.mubr.bf16.mxu0 0
        %884 = vmatmul.mubr.bf16.gmra.mrb[0].mxu0 %v825
        %v885 = vpop.f32.mrb[0].mxu0
        %v886 = vadd.f32 0.0, %v885
        %v887 = vpop.f32.mrb[0].mxu0
        %v888 = vpop.f32.mrb[0].mxu0
        %v889 = vadd.f32 0.0, %v888
        %v890 = vpop.f32.mrb[0].mxu0
        %891 = vdwg.mxu0
        %v900 = vunpack.c.l.b16 %v661
        %v901 = vunpack.c.l.b16 %v662
        %v902 = vunpack.c.l.b16 %v663
        %v903 = vunpack.c.l.b16 %v664
        %v904 = vunpack.c.l.b16 %v665
        %v905 = vunpack.c.l.b16 %v666
        %v906 = vunpack.c.l.b16 %v667
        %v907 = vunpack.c.l.b16 %v668
        %v908 = vpack.c.b16 %v901, %v900
        %v909 = vpack.c.b16 %v903, %v902
        %v910 = vpack.c.b16 %v905, %v904
        %v911 = vpack.c.b16 %v907, %v906
        %v914 = vunpack.c.l.b16 %v669
        %v915 = vunpack.c.l.b16 %v670
        %v916 = vpack.c.b16 %v915, %v914
        %v919 = vsel %vm394, %v908, 0
        %v922 = vsel %vm394, %v909, 0
        %v925 = vsel %vm394, %v910, 0
        %v928 = vsel %vm394, %v911, 0
        %930 = vmatprep.subr.bf16.mxu0 0
        %931 = vmatpush1.bf16.msra.mxu0 %v916
        %932 = vmatprep.subr.bf16.mxu0 0
        %933 = vmatpush1.bf16.msra.mxu0 0
        %934 = vmatprep.subr.bf16.mxu0 0
        %935 = vmatpush1.bf16.msra.mxu0 0
        %936 = vmatprep.subr.bf16.mxu0 0
        %937 = vmatpush1.bf16.msra.mxu0 0
        %938 = vmatprep.subr.bf16.mxu0 0
        %939 = vmatpush1.bf16.msra.mxu0 0
        %940 = vmatprep.subr.bf16.mxu0 0
        %941 = vmatpush1.bf16.msra.mxu0 0
        %942 = vmatprep.subr.bf16.mxu0 0
        %943 = vmatpush1.bf16.msra.mxu0 0
        %944 = vmatprep.subr.bf16.mxu0 0
        %945 = vmatpush1.bf16.msra.mxu0 0
        %946 = vmatprep.subr.bf16.mxu0 0
        %947 = vmatpush1.bf16.msra.mxu0 0
        %948 = vmatprep.subr.bf16.mxu0 0
        %949 = vmatpush1.bf16.msra.mxu0 0
        %950 = vmatprep.subr.bf16.mxu0 0
        %951 = vmatpush1.bf16.msra.mxu0 0
        %952 = vmatprep.subr.bf16.mxu0 0
        %953 = vmatpush1.bf16.msra.mxu0 0
        %954 = vmatprep.subr.bf16.mxu0 0
        %955 = vmatpush1.bf16.msra.mxu0 0
        %956 = vmatprep.subr.bf16.mxu0 0
        %957 = vmatpush1.bf16.msra.mxu0 0
        %958 = vmatprep.subr.bf16.mxu0 0
        %959 = vmatpush1.bf16.msra.mxu0 0
        %960 = vmatprep.subr.bf16.mxu0 0
        %961 = vmatpush1.bf16.msra.mxu0 0
        %962 = vmatprep.mubr.bf16.mxu0 0
        %963 = vmatmul.mubr.bf16.gmra.mrb[0].mxu0 %v919
        %v964 = vpop.f32.mrb[0].mxu0
        %v965 = vadd.f32 %v862, %v964
        %v966 = vpop.f32.mrb[0].mxu0
        %v967 = vpop.f32.mrb[0].mxu0
        %v968 = vadd.f32 %v865, %v967
        %v969 = vpop.f32.mrb[0].mxu0
        %970 = vmatprep.mubr.bf16.mxu0 0
        %971 = vmatmul.mubr.bf16.gmra.mrb[0].mxu0 %v922
        %v972 = vpop.f32.mrb[0].mxu0
        %v973 = vadd.f32 %v870, %v972
        %v974 = vpop.f32.mrb[0].mxu0
        %v975 = vpop.f32.mrb[0].mxu0
        %v976 = vadd.f32 %v873, %v975
        %v977 = vpop.f32.mrb[0].mxu0
        %978 = vmatprep.mubr.bf16.mxu0 0
        %979 = vmatmul.mubr.bf16.gmra.mrb[0].mxu0 %v925
        %v980 = vpop.f32.mrb[0].mxu0
        %v981 = vadd.f32 %v878, %v980
        %v982 = vpop.f32.mrb[0].mxu0
        %v983 = vpop.f32.mrb[0].mxu0
        %v984 = vadd.f32 %v881, %v983
        %v985 = vpop.f32.mrb[0].mxu0
        %986 = vmatprep.mubr.bf16.mxu0 0
        %987 = vmatmul.mubr.bf16.gmra.mrb[0].mxu0 %v928
        %v988 = vpop.f32.mrb[0].mxu0
        %v989 = vadd.f32 %v886, %v988
        %v990 = vpop.f32.mrb[0].mxu0
        %v991 = vpop.f32.mrb[0].mxu0
        %v992 = vadd.f32 %v889, %v991
        %v993 = vpop.f32.mrb[0].mxu0
        %994 = vdwg.mxu0
        %v995 = vld [vmem:[#allocation2] sm:$0xe]
        %v996 = vld [vmem:[#allocation2 + $0x8] sm:$0xe]
        %v997 = vld [vmem:[#allocation2 + $0x10] sm:$0xe]
        %v998 = vld [vmem:[#allocation2 + $0x18] sm:$0xe]
        %v999 = vld [vmem:[#allocation2 + $0x20] sm:$0xe]
        %v1000 = vld [vmem:[#allocation2 + $0x28] sm:$0xe]
        %v1001 = vld [vmem:[#allocation2 + $0x30] sm:$0xe]
        %v1002 = vld [vmem:[#allocation2 + $0x38] sm:$0xe]
        %vm1019 = vcmask 1042432
        %vm1020 = vcmask 1046532
        %vm1021 = vmor %vm1019, %vm1020
        %v1022 = vrot.slane %v995, 5
        %v1023 = vrot.slane %v1022, 4
        %v1024 = vrot.slane %v671, 5
        %v1025 = vsel %vm1021, %v1023, %v1024
        %v1026 = vrot.slane %v996, 5
        %v1027 = vrot.slane %v1026, 4
        %v1028 = vrot.slane %v672, 5
        %v1029 = vsel %vm1021, %v1027, %v1028
        %v1030 = vrot.slane %v997, 5
        %v1031 = vrot.slane %v1030, 4
        %v1032 = vrot.slane %v673, 5
        %v1033 = vsel %vm1021, %v1031, %v1032
        %v1034 = vrot.slane %v998, 5
        %v1035 = vrot.slane %v1034, 4
        %v1036 = vrot.slane %v674, 5
        %v1037 = vsel %vm1021, %v1035, %v1036
        %v1038 = vrot.slane %v999, 5
        %v1039 = vrot.slane %v1038, 4
        %v1040 = vrot.slane %v675, 5
        %v1041 = vsel %vm1021, %v1039, %v1040
        %v1042 = vrot.slane %v1000, 5
        %v1043 = vrot.slane %v1042, 4
        %v1044 = vrot.slane %v676, 5
        %v1045 = vsel %vm1021, %v1043, %v1044
        %v1046 = vrot.slane %v1001, 5
        %v1047 = vrot.slane %v1046, 4
        %v1048 = vrot.slane %v677, 5
        %v1049 = vsel %vm1021, %v1047, %v1048
        %v1050 = vrot.slane %v1002, 5
        %v1051 = vrot.slane %v1050, 4
        %v1052 = vrot.slane %v678, 5
        %v1053 = vsel %vm1021, %v1051, %v1052
        %s1054 = scalar_lea.vmem [#allocation6], 16
        %v1055 = vld [vmem:[%s1054] sm:$0xf]
        %v1056 = vld [vmem:[%s1054 + $0x4] sm:$0xf]
        %v1057 = vunpack.c.l.b16 %v1025
        %v1058 = vunpack.c.l.b16 %v1029
        %v1059 = vunpack.c.l.b16 %v1033
        %v1060 = vunpack.c.l.b16 %v1037
        %v1061 = vunpack.c.l.b16 %v1041
        %v1062 = vunpack.c.l.b16 %v1045
        %v1063 = vunpack.c.l.b16 %v1049
        %v1064 = vunpack.c.l.b16 %v1053
        %v1065 = vpack.c.b16 %v1058, %v1057
        %v1066 = vpack.c.b16 %v1060, %v1059
        %v1067 = vpack.c.b16 %v1062, %v1061
        %v1068 = vpack.c.b16 %v1064, %v1063
        %v1071 = vunpack.c.l.b16 %v1055
        %v1072 = vunpack.c.l.b16 %v1056
        %v1073 = vpack.c.b16 %v1072, %v1071
        %v1076 = vsel %vm394, %v1065, 0
        %v1079 = vsel %vm394, %v1066, 0
        %v1082 = vsel %vm394, %v1067, 0
        %v1085 = vsel %vm394, %v1068, 0
        %1087 = vmatprep.subr.bf16.mxu0 0
        %1088 = vmatpush1.bf16.msra.mxu0 %v1073
        %1089 = vmatprep.subr.bf16.mxu0 0
        %1090 = vmatpush1.bf16.msra.mxu0 0
        %1091 = vmatprep.subr.bf16.mxu0 0
        %1092 = vmatpush1.bf16.msra.mxu0 0
        %1093 = vmatprep.subr.bf16.mxu0 0
        %1094 = vmatpush1.bf16.msra.mxu0 0
        %1095 = vmatprep.subr.bf16.mxu0 0
        %1096 = vmatpush1.bf16.msra.mxu0 0
        %1097 = vmatprep.subr.bf16.mxu0 0
        %1098 = vmatpush1.bf16.msra.mxu0 0
        %1099 = vmatprep.subr.bf16.mxu0 0
        %1100 = vmatpush1.bf16.msra.mxu0 0
        %1101 = vmatprep.subr.bf16.mxu0 0
        %1102 = vmatpush1.bf16.msra.mxu0 0
        %1103 = vmatprep.subr.bf16.mxu0 0
        %1104 = vmatpush1.bf16.msra.mxu0 0
        %1105 = vmatprep.subr.bf16.mxu0 0
        %1106 = vmatpush1.bf16.msra.mxu0 0
        %1107 = vmatprep.subr.bf16.mxu0 0
        %1108 = vmatpush1.bf16.msra.mxu0 0
        %1109 = vmatprep.subr.bf16.mxu0 0
        %1110 = vmatpush1.bf16.msra.mxu0 0
        %1111 = vmatprep.subr.bf16.mxu0 0
        %1112 = vmatpush1.bf16.msra.mxu0 0
        %1113 = vmatprep.subr.bf16.mxu0 0
        %1114 = vmatpush1.bf16.msra.mxu0 0
        %1115 = vmatprep.subr.bf16.mxu0 0
        %1116 = vmatpush1.bf16.msra.mxu0 0
        %1117 = vmatprep.subr.bf16.mxu0 0
        %1118 = vmatpush1.bf16.msra.mxu0 0
        %1119 = vmatprep.mubr.bf16.mxu0 0
        %1120 = vmatmul.mubr.bf16.gmra.mrb[0].mxu0 %v1076
        %v1121 = vpop.f32.mrb[0].mxu0
        %v1122 = vadd.f32 0.0, %v1121
        %v1123 = vpop.f32.mrb[0].mxu0
        %v1124 = vpop.f32.mrb[0].mxu0
        %v1125 = vadd.f32 0.0, %v1124
        %v1126 = vpop.f32.mrb[0].mxu0
        %1127 = vmatprep.mubr.bf16.mxu0 0
        %1128 = vmatmul.mubr.bf16.gmra.mrb[0].mxu0 %v1079
        %v1129 = vpop.f32.mrb[0].mxu0
        %v1130 = vadd.f32 0.0, %v1129
        %v1131 = vpop.f32.mrb[0].mxu0
        %v1132 = vpop.f32.mrb[0].mxu0
        %v1133 = vadd.f32 0.0, %v1132
        %v1134 = vpop.f32.mrb[0].mxu0
        %1135 = vmatprep.mubr.bf16.mxu0 0
        %1136 = vmatmul.mubr.bf16.gmra.mrb[0].mxu0 %v1082
        %v1137 = vpop.f32.mrb[0].mxu0
        %v1138 = vadd.f32 0.0, %v1137
        %v1139 = vpop.f32.mrb[0].mxu0
        %v1140 = vpop.f32.mrb[0].mxu0
        %v1141 = vadd.f32 0.0, %v1140
        %v1142 = vpop.f32.mrb[0].mxu0
        %1143 = vmatprep.mubr.bf16.mxu0 0
        %1144 = vmatmul.mubr.bf16.gmra.mrb[0].mxu0 %v1085
        %v1145 = vpop.f32.mrb[0].mxu0
        %v1146 = vadd.f32 0.0, %v1145
        %v1147 = vpop.f32.mrb[0].mxu0
        %v1148 = vpop.f32.mrb[0].mxu0
        %v1149 = vadd.f32 0.0, %v1148
        %v1150 = vpop.f32.mrb[0].mxu0
        %1151 = vdwg.mxu0
        %v1152 = vadd.f32 %v965, %v1122
        %v1153 = vadd.f32 %v968, %v1125
        %v1154 = vadd.f32 %v973, %v1130
        %v1155 = vadd.f32 %v976, %v1133
        %v1156 = vadd.f32 %v981, %v1138
        %v1157 = vadd.f32 %v984, %v1141
        %v1158 = vadd.f32 %v989, %v1146
        %v1159 = vadd.f32 %v992, %v1149
        %v1160 = vld [vmem:[%s606] sm:$0xf]
        %v1161 = vld [vmem:[%s606 + $0x8] sm:$0xf]
        %v1162 = vld [vmem:[%s606 + $0x10] sm:$0xf]
        %v1163 = vld [vmem:[%s606 + $0x18] sm:$0xf]
        %v1164 = vld [vmem:[%s606 + $0x20] sm:$0xf]
        %v1165 = vld [vmem:[%s606 + $0x28] sm:$0xf]
        %v1166 = vld [vmem:[%s606 + $0x30] sm:$0xf]
        %v1167 = vld [vmem:[%s606 + $0x38] sm:$0xf]
        %s1168 = scalar_lea.vmem [#allocation6], 24
        %v1169 = vld [vmem:[%s1168] sm:$0xf]
        %v1170 = vld [vmem:[%s1168 + $0x4] sm:$0xf]
        %v1179 = vunpack.c.l.b16 %v1160
        %v1180 = vunpack.c.l.b16 %v1161
        %v1181 = vunpack.c.l.b16 %v1162
        %v1182 = vunpack.c.l.b16 %v1163
        %v1183 = vunpack.c.l.b16 %v1164
        %v1184 = vunpack.c.l.b16 %v1165
        %v1185 = vunpack.c.l.b16 %v1166
        %v1186 = vunpack.c.l.b16 %v1167
        %v1187 = vpack.c.b16 %v1180, %v1179
        %v1188 = vpack.c.b16 %v1182, %v1181
        %v1189 = vpack.c.b16 %v1184, %v1183
        %v1190 = vpack.c.b16 %v1186, %v1185
        %v1193 = vunpack.c.l.b16 %v1169
        %v1194 = vunpack.c.l.b16 %v1170
        %v1195 = vpack.c.b16 %v1194, %v1193
        %v1198 = vsel %vm394, %v1187, 0
        %v1201 = vsel %vm394, %v1188, 0
        %v1204 = vsel %vm394, %v1189, 0
        %v1207 = vsel %vm394, %v1190, 0
        %1209 = vmatprep.subr.bf16.mxu0 0
        %1210 = vmatpush1.bf16.msra.mxu0 %v1195
        %1211 = vmatprep.subr.bf16.mxu0 0
        %1212 = vmatpush1.bf16.msra.mxu0 0
        %1213 = vmatprep.subr.bf16.mxu0 0
        %1214 = vmatpush1.bf16.msra.mxu0 0
        %1215 = vmatprep.subr.bf16.mxu0 0
        %1216 = vmatpush1.bf16.msra.mxu0 0
        %1217 = vmatprep.subr.bf16.mxu0 0
        %1218 = vmatpush1.bf16.msra.mxu0 0
        %1219 = vmatprep.subr.bf16.mxu0 0
        %1220 = vmatpush1.bf16.msra.mxu0 0
        %1221 = vmatprep.subr.bf16.mxu0 0
        %1222 = vmatpush1.bf16.msra.mxu0 0
        %1223 = vmatprep.subr.bf16.mxu0 0
        %1224 = vmatpush1.bf16.msra.mxu0 0
        %1225 = vmatprep.subr.bf16.mxu0 0
        %1226 = vmatpush1.bf16.msra.mxu0 0
        %1227 = vmatprep.subr.bf16.mxu0 0
        %1228 = vmatpush1.bf16.msra.mxu0 0
        %1229 = vmatprep.subr.bf16.mxu0 0
        %1230 = vmatpush1.bf16.msra.mxu0 0
        %1231 = vmatprep.subr.bf16.mxu0 0
        %1232 = vmatpush1.bf16.msra.mxu0 0
        %1233 = vmatprep.subr.bf16.mxu0 0
        %1234 = vmatpush1.bf16.msra.mxu0 0
        %1235 = vmatprep.subr.bf16.mxu0 0
        %1236 = vmatpush1.bf16.msra.mxu0 0
        %1237 = vmatprep.subr.bf16.mxu0 0
        %1238 = vmatpush1.bf16.msra.mxu0 0
        %1239 = vmatprep.subr.bf16.mxu0 0
        %1240 = vmatpush1.bf16.msra.mxu0 0
        %1241 = vmatprep.mubr.bf16.mxu0 0
        %1242 = vmatmul.mubr.bf16.gmra.mrb[0].mxu0 %v1198
        %v1243 = vpop.f32.mrb[0].mxu0
        %v1244 = vadd.f32 0.0, %v1243
        %v1245 = vpop.f32.mrb[0].mxu0
        %v1246 = vpop.f32.mrb[0].mxu0
        %v1247 = vadd.f32 0.0, %v1246
        %v1248 = vpop.f32.mrb[0].mxu0
        %1249 = vmatprep.mubr.bf16.mxu0 0
        %1250 = vmatmul.mubr.bf16.gmra.mrb[0].mxu0 %v1201
        %v1251 = vpop.f32.mrb[0].mxu0
        %v1252 = vadd.f32 0.0, %v1251
        %v1253 = vpop.f32.mrb[0].mxu0
        %v1254 = vpop.f32.mrb[0].mxu0
        %v1255 = vadd.f32 0.0, %v1254
        %v1256 = vpop.f32.mrb[0].mxu0
        %1257 = vmatprep.mubr.bf16.mxu0 0
        %1258 = vmatmul.mubr.bf16.gmra.mrb[0].mxu0 %v1204
        %v1259 = vpop.f32.mrb[0].mxu0
        %v1260 = vadd.f32 0.0, %v1259
        %v1261 = vpop.f32.mrb[0].mxu0
        %v1262 = vpop.f32.mrb[0].mxu0
        %v1263 = vadd.f32 0.0, %v1262
        %v1264 = vpop.f32.mrb[0].mxu0
        %1265 = vmatprep.mubr.bf16.mxu0 0
        %1266 = vmatmul.mubr.bf16.gmra.mrb[0].mxu0 %v1207
        %v1267 = vpop.f32.mrb[0].mxu0
        %v1268 = vadd.f32 0.0, %v1267
        %v1269 = vpop.f32.mrb[0].mxu0
        %v1270 = vpop.f32.mrb[0].mxu0
        %v1271 = vadd.f32 0.0, %v1270
        %v1272 = vpop.f32.mrb[0].mxu0
        %1273 = vdwg.mxu0
        %v1274 = vadd.f32 %v1152, %v1244
        %v1275 = vadd.f32 %v1153, %v1247
        %v1276 = vadd.f32 %v1154, %v1252
        %v1277 = vadd.f32 %v1155, %v1255
        %v1278 = vadd.f32 %v1156, %v1260
        %v1279 = vadd.f32 %v1157, %v1263
        %v1280 = vadd.f32 %v1158, %v1268
        %v1281 = vadd.f32 %v1159, %v1271
        %v1282 = vld [vmem:[%s606] sm:$0xf]
        %v1283 = vld [vmem:[%s606 + $0x4] sm:$0x1]
        %v1284 = vld [vmem:[%s606 + $0x8] sm:$0xf]
        %v1285 = vld [vmem:[%s606 + $0xc] sm:$0x1]
        %v1286 = vld [vmem:[%s606 + $0x10] sm:$0xf]
        %v1287 = vld [vmem:[%s606 + $0x14] sm:$0x1]
        %v1288 = vld [vmem:[%s606 + $0x18] sm:$0xf]
        %v1289 = vld [vmem:[%s606 + $0x1c] sm:$0x1]
        %v1290 = vld [vmem:[%s606 + $0x20] sm:$0xf]
        %v1291 = vld [vmem:[%s606 + $0x24] sm:$0x1]
        %v1292 = vld [vmem:[%s606 + $0x28] sm:$0xf]
        %v1293 = vld [vmem:[%s606 + $0x2c] sm:$0x1]
        %v1294 = vld [vmem:[%s606 + $0x30] sm:$0xf]
        %v1295 = vld [vmem:[%s606 + $0x34] sm:$0x1]
        %v1296 = vld [vmem:[%s606 + $0x38] sm:$0xf]
        %v1297 = vld [vmem:[%s606 + $0x3c] sm:$0x1]
        %v1299 = vshrl.u32 %v1282, 16
        %v1301 = vrot.slane %v1299, 4
        %v1302 = vshll.u32 %v1282, 16
        %v1304 = vrot.slane %v1302, 5
        %v1305 = vor.u32 %v1301, %v1304
        %v1306 = vrot.slane %v1305, 4
        %v1308 = vshll.u32 %v1283, 16
        %v1310 = vrot.slane %v1308, 5
        %v1311 = vsel %vm681, %v1306, %v1310
        %v1313 = vshrl.u32 %v1284, 16
        %v1315 = vrot.slane %v1313, 4
        %v1316 = vshll.u32 %v1284, 16
        %v1318 = vrot.slane %v1316, 5
        %v1319 = vor.u32 %v1315, %v1318
        %v1320 = vrot.slane %v1319, 4
        %v1322 = vshll.u32 %v1285, 16
        %v1324 = vrot.slane %v1322, 5
        %v1325 = vsel %vm681, %v1320, %v1324
        %v1327 = vshrl.u32 %v1286, 16
        %v1329 = vrot.slane %v1327, 4
        %v1330 = vshll.u32 %v1286, 16
        %v1332 = vrot.slane %v1330, 5
        %v1333 = vor.u32 %v1329, %v1332
        %v1334 = vrot.slane %v1333, 4
        %v1336 = vshll.u32 %v1287, 16
        %v1338 = vrot.slane %v1336, 5
        %v1339 = vsel %vm681, %v1334, %v1338
        %v1341 = vshrl.u32 %v1288, 16
        %v1343 = vrot.slane %v1341, 4
        %v1344 = vshll.u32 %v1288, 16
        %v1346 = vrot.slane %v1344, 5
        %v1347 = vor.u32 %v1343, %v1346
        %v1348 = vrot.slane %v1347, 4
        %v1350 = vshll.u32 %v1289, 16
        %v1352 = vrot.slane %v1350, 5
        %v1353 = vsel %vm681, %v1348, %v1352
        %v1355 = vshrl.u32 %v1290, 16
        %v1357 = vrot.slane %v1355, 4
        %v1358 = vshll.u32 %v1290, 16
        %v1360 = vrot.slane %v1358, 5
        %v1361 = vor.u32 %v1357, %v1360
        %v1362 = vrot.slane %v1361, 4
        %v1364 = vshll.u32 %v1291, 16
        %v1366 = vrot.slane %v1364, 5
        %v1367 = vsel %vm681, %v1362, %v1366
        %v1369 = vshrl.u32 %v1292, 16
        %v1371 = vrot.slane %v1369, 4
        %v1372 = vshll.u32 %v1292, 16
        %v1374 = vrot.slane %v1372, 5
        %v1375 = vor.u32 %v1371, %v1374
        %v1376 = vrot.slane %v1375, 4
        %v1378 = vshll.u32 %v1293, 16
        %v1380 = vrot.slane %v1378, 5
        %v1381 = vsel %vm681, %v1376, %v1380
        %v1383 = vshrl.u32 %v1294, 16
        %v1385 = vrot.slane %v1383, 4
        %v1386 = vshll.u32 %v1294, 16
        %v1388 = vrot.slane %v1386, 5
        %v1389 = vor.u32 %v1385, %v1388
        %v1390 = vrot.slane %v1389, 4
        %v1392 = vshll.u32 %v1295, 16
        %v1394 = vrot.slane %v1392, 5
        %v1395 = vsel %vm681, %v1390, %v1394
        %v1397 = vshrl.u32 %v1296, 16
        %v1399 = vrot.slane %v1397, 4
        %v1400 = vshll.u32 %v1296, 16
        %v1402 = vrot.slane %v1400, 5
        %v1403 = vor.u32 %v1399, %v1402
        %v1404 = vrot.slane %v1403, 4
        %v1406 = vshll.u32 %v1297, 16
        %v1408 = vrot.slane %v1406, 5
        %v1409 = vsel %vm681, %v1404, %v1408
        %s1410 = scalar_lea.vmem [#allocation6], 32
        %v1411 = vld [vmem:[%s1410] sm:$0xf]
        %v1412 = vld [vmem:[%s1410 + $0x4] sm:$0xf]
        %v1413 = vunpack.c.l.b16 %v1311
        %v1414 = vunpack.c.l.b16 %v1325
        %v1415 = vunpack.c.l.b16 %v1339
        %v1416 = vunpack.c.l.b16 %v1353
        %v1417 = vunpack.c.l.b16 %v1367
        %v1418 = vunpack.c.l.b16 %v1381
        %v1419 = vunpack.c.l.b16 %v1395
        %v1420 = vunpack.c.l.b16 %v1409
        %v1421 = vpack.c.b16 %v1414, %v1413
        %v1422 = vpack.c.b16 %v1416, %v1415
        %v1423 = vpack.c.b16 %v1418, %v1417
        %v1424 = vpack.c.b16 %v1420, %v1419
        %v1427 = vunpack.c.l.b16 %v1411
        %v1428 = vunpack.c.l.b16 %v1412
        %v1429 = vpack.c.b16 %v1428, %v1427
        %v1432 = vsel %vm394, %v1421, 0
        %v1435 = vsel %vm394, %v1422, 0
        %v1438 = vsel %vm394, %v1423, 0
        %v1441 = vsel %vm394, %v1424, 0
        %1443 = vmatprep.subr.bf16.mxu0 0
        %1444 = vmatpush1.bf16.msra.mxu0 %v1429
        %1445 = vmatprep.subr.bf16.mxu0 0
        %1446 = vmatpush1.bf16.msra.mxu0 0
        %1447 = vmatprep.subr.bf16.mxu0 0
        %1448 = vmatpush1.bf16.msra.mxu0 0
        %1449 = vmatprep.subr.bf16.mxu0 0
        %1450 = vmatpush1.bf16.msra.mxu0 0
        %1451 = vmatprep.subr.bf16.mxu0 0
        %1452 = vmatpush1.bf16.msra.mxu0 0
        %1453 = vmatprep.subr.bf16.mxu0 0
        %1454 = vmatpush1.bf16.msra.mxu0 0
        %1455 = vmatprep.subr.bf16.mxu0 0
        %1456 = vmatpush1.bf16.msra.mxu0 0
        %1457 = vmatprep.subr.bf16.mxu0 0
        %1458 = vmatpush1.bf16.msra.mxu0 0
        %1459 = vmatprep.subr.bf16.mxu0 0
        %1460 = vmatpush1.bf16.msra.mxu0 0
        %1461 = vmatprep.subr.bf16.mxu0 0
        %1462 = vmatpush1.bf16.msra.mxu0 0
        %1463 = vmatprep.subr.bf16.mxu0 0
        %1464 = vmatpush1.bf16.msra.mxu0 0
        %1465 = vmatprep.subr.bf16.mxu0 0
        %1466 = vmatpush1.bf16.msra.mxu0 0
        %1467 = vmatprep.subr.bf16.mxu0 0
        %1468 = vmatpush1.bf16.msra.mxu0 0
        %1469 = vmatprep.subr.bf16.mxu0 0
        %1470 = vmatpush1.bf16.msra.mxu0 0
        %1471 = vmatprep.subr.bf16.mxu0 0
        %1472 = vmatpush1.bf16.msra.mxu0 0
        %1473 = vmatprep.subr.bf16.mxu0 0
        %1474 = vmatpush1.bf16.msra.mxu0 0
        %1475 = vmatprep.mubr.bf16.mxu0 0
        %1476 = vmatmul.mubr.bf16.gmra.mrb[0].mxu0 %v1432
        %v1477 = vpop.f32.mrb[0].mxu0
        %v1478 = vadd.f32 0.0, %v1477
        %v1479 = vpop.f32.mrb[0].mxu0
        %v1480 = vpop.f32.mrb[0].mxu0
        %v1481 = vadd.f32 0.0, %v1480
        %v1482 = vpop.f32.mrb[0].mxu0
        %1483 = vmatprep.mubr.bf16.mxu0 0
        %1484 = vmatmul.mubr.bf16.gmra.mrb[0].mxu0 %v1435
        %v1485 = vpop.f32.mrb[0].mxu0
        %v1486 = vadd.f32 0.0, %v1485
        %v1487 = vpop.f32.mrb[0].mxu0
        %v1488 = vpop.f32.mrb[0].mxu0
        %v1489 = vadd.f32 0.0, %v1488
        %v1490 = vpop.f32.mrb[0].mxu0
        %1491 = vmatprep.mubr.bf16.mxu0 0
        %1492 = vmatmul.mubr.bf16.gmra.mrb[0].mxu0 %v1438
        %v1493 = vpop.f32.mrb[0].mxu0
        %v1494 = vadd.f32 0.0, %v1493
        %v1495 = vpop.f32.mrb[0].mxu0
        %v1496 = vpop.f32.mrb[0].mxu0
        %v1497 = vadd.f32 0.0, %v1496
        %v1498 = vpop.f32.mrb[0].mxu0
        %1499 = vmatprep.mubr.bf16.mxu0 0
        %1500 = vmatmul.mubr.bf16.gmra.mrb[0].mxu0 %v1441
        %v1501 = vpop.f32.mrb[0].mxu0
        %v1502 = vadd.f32 0.0, %v1501
        %v1503 = vpop.f32.mrb[0].mxu0
        %v1504 = vpop.f32.mrb[0].mxu0
        %v1505 = vadd.f32 0.0, %v1504
        %v1506 = vpop.f32.mrb[0].mxu0
        %1507 = vdwg.mxu0
        %v1508 = vadd.f32 %v1274, %v1478
        %v1509 = vadd.f32 %v1275, %v1481
        %v1510 = vadd.f32 %v1276, %v1486
        %v1511 = vadd.f32 %v1277, %v1489
        %v1512 = vadd.f32 %v1278, %v1494
        %v1513 = vadd.f32 %v1279, %v1497
        %v1514 = vadd.f32 %v1280, %v1502
        %v1515 = vadd.f32 %v1281, %v1505
        %v1516 = vld [vmem:[%s606] sm:$0xe]
        %v1517 = vld [vmem:[%s606 + $0x8] sm:$0xe]
        %v1518 = vld [vmem:[%s606 + $0x10] sm:$0xe]
        %v1519 = vld [vmem:[%s606 + $0x18] sm:$0xe]
        %v1520 = vld [vmem:[%s606 + $0x20] sm:$0xe]
        %v1521 = vld [vmem:[%s606 + $0x28] sm:$0xe]
        %v1522 = vld [vmem:[%s606 + $0x30] sm:$0xe]
        %v1523 = vld [vmem:[%s606 + $0x38] sm:$0xe]
        %v1540 = vrot.slane %v1516, 5
        %v1541 = vrot.slane %v1540, 4
        %v1542 = vrot.slane %v1283, 5
        %v1543 = vsel %vm1021, %v1541, %v1542
        %v1544 = vrot.slane %v1517, 5
        %v1545 = vrot.slane %v1544, 4
        %v1546 = vrot.slane %v1285, 5
        %v1547 = vsel %vm1021, %v1545, %v1546
        %v1548 = vrot.slane %v1518, 5
        %v1549 = vrot.slane %v1548, 4
        %v1550 = vrot.slane %v1287, 5
        %v1551 = vsel %vm1021, %v1549, %v1550
        %v1552 = vrot.slane %v1519, 5
        %v1553 = vrot.slane %v1552, 4
        %v1554 = vrot.slane %v1289, 5
        %v1555 = vsel %vm1021, %v1553, %v1554
        %v1556 = vrot.slane %v1520, 5
        %v1557 = vrot.slane %v1556, 4
        %v1558 = vrot.slane %v1291, 5
        %v1559 = vsel %vm1021, %v1557, %v1558
        %v1560 = vrot.slane %v1521, 5
        %v1561 = vrot.slane %v1560, 4
        %v1562 = vrot.slane %v1293, 5
        %v1563 = vsel %vm1021, %v1561, %v1562
        %v1564 = vrot.slane %v1522, 5
        %v1565 = vrot.slane %v1564, 4
        %v1566 = vrot.slane %v1295, 5
        %v1567 = vsel %vm1021, %v1565, %v1566
        %v1568 = vrot.slane %v1523, 5
        %v1569 = vrot.slane %v1568, 4
        %v1570 = vrot.slane %v1297, 5
        %v1571 = vsel %vm1021, %v1569, %v1570
        %s1572 = scalar_lea.vmem [#allocation6], 40
        %v1573 = vld [vmem:[%s1572] sm:$0xf]
        %v1574 = vld [vmem:[%s1572 + $0x4] sm:$0xf]
        %v1575 = vunpack.c.l.b16 %v1543
        %v1576 = vunpack.c.l.b16 %v1547
        %v1577 = vunpack.c.l.b16 %v1551
        %v1578 = vunpack.c.l.b16 %v1555
        %v1579 = vunpack.c.l.b16 %v1559
        %v1580 = vunpack.c.l.b16 %v1563
        %v1581 = vunpack.c.l.b16 %v1567
        %v1582 = vunpack.c.l.b16 %v1571
        %v1583 = vpack.c.b16 %v1576, %v1575
        %v1584 = vpack.c.b16 %v1578, %v1577
        %v1585 = vpack.c.b16 %v1580, %v1579
        %v1586 = vpack.c.b16 %v1582, %v1581
        %v1589 = vunpack.c.l.b16 %v1573
        %v1590 = vunpack.c.l.b16 %v1574
        %v1591 = vpack.c.b16 %v1590, %v1589
        %v1594 = vsel %vm394, %v1583, 0
        %v1597 = vsel %vm394, %v1584, 0
        %v1600 = vsel %vm394, %v1585, 0
        %v1603 = vsel %vm394, %v1586, 0
        %1605 = vmatprep.subr.bf16.mxu0 0
        %1606 = vmatpush1.bf16.msra.mxu0 %v1591
        %1607 = vmatprep.subr.bf16.mxu0 0
        %1608 = vmatpush1.bf16.msra.mxu0 0
        %1609 = vmatprep.subr.bf16.mxu0 0
        %1610 = vmatpush1.bf16.msra.mxu0 0
        %1611 = vmatprep.subr.bf16.mxu0 0
        %1612 = vmatpush1.bf16.msra.mxu0 0
        %1613 = vmatprep.subr.bf16.mxu0 0
        %1614 = vmatpush1.bf16.msra.mxu0 0
        %1615 = vmatprep.subr.bf16.mxu0 0
        %1616 = vmatpush1.bf16.msra.mxu0 0
        %1617 = vmatprep.subr.bf16.mxu0 0
        %1618 = vmatpush1.bf16.msra.mxu0 0
        %1619 = vmatprep.subr.bf16.mxu0 0
        %1620 = vmatpush1.bf16.msra.mxu0 0
        %1621 = vmatprep.subr.bf16.mxu0 0
        %1622 = vmatpush1.bf16.msra.mxu0 0
        %1623 = vmatprep.subr.bf16.mxu0 0
        %1624 = vmatpush1.bf16.msra.mxu0 0
        %1625 = vmatprep.subr.bf16.mxu0 0
        %1626 = vmatpush1.bf16.msra.mxu0 0
        %1627 = vmatprep.subr.bf16.mxu0 0
        %1628 = vmatpush1.bf16.msra.mxu0 0
        %1629 = vmatprep.subr.bf16.mxu0 0
        %1630 = vmatpush1.bf16.msra.mxu0 0
        %1631 = vmatprep.subr.bf16.mxu0 0
        %1632 = vmatpush1.bf16.msra.mxu0 0
        %1633 = vmatprep.subr.bf16.mxu0 0
        %1634 = vmatpush1.bf16.msra.mxu0 0
        %1635 = vmatprep.subr.bf16.mxu0 0
        %1636 = vmatpush1.bf16.msra.mxu0 0
        %1637 = vmatprep.mubr.bf16.mxu0 0
        %1638 = vmatmul.mubr.bf16.gmra.mrb[0].mxu0 %v1594
        %v1639 = vpop.f32.mrb[0].mxu0
        %v1640 = vadd.f32 0.0, %v1639
        %v1641 = vpop.f32.mrb[0].mxu0
        %v1642 = vpop.f32.mrb[0].mxu0
        %v1643 = vadd.f32 0.0, %v1642
        %v1644 = vpop.f32.mrb[0].mxu0
        %1645 = vmatprep.mubr.bf16.mxu0 0
        %1646 = vmatmul.mubr.bf16.gmra.mrb[0].mxu0 %v1597
        %v1647 = vpop.f32.mrb[0].mxu0
        %v1648 = vadd.f32 0.0, %v1647
        %v1649 = vpop.f32.mrb[0].mxu0
        %v1650 = vpop.f32.mrb[0].mxu0
        %v1651 = vadd.f32 0.0, %v1650
        %v1652 = vpop.f32.mrb[0].mxu0
        %1653 = vmatprep.mubr.bf16.mxu0 0
        %1654 = vmatmul.mubr.bf16.gmra.mrb[0].mxu0 %v1600
        %v1655 = vpop.f32.mrb[0].mxu0
        %v1656 = vadd.f32 0.0, %v1655
        %v1657 = vpop.f32.mrb[0].mxu0
        %v1658 = vpop.f32.mrb[0].mxu0
        %v1659 = vadd.f32 0.0, %v1658
        %v1660 = vpop.f32.mrb[0].mxu0
        %1661 = vmatprep.mubr.bf16.mxu0 0
        %1662 = vmatmul.mubr.bf16.gmra.mrb[0].mxu0 %v1603
        %v1663 = vpop.f32.mrb[0].mxu0
        %v1664 = vadd.f32 0.0, %v1663
        %v1665 = vpop.f32.mrb[0].mxu0
        %v1666 = vpop.f32.mrb[0].mxu0
        %v1667 = vadd.f32 0.0, %v1666
        %v1668 = vpop.f32.mrb[0].mxu0
        %1669 = vdwg.mxu0
        %v1670 = vadd.f32 %v1508, %v1640
        %v1671 = vadd.f32 %v1509, %v1643
        %v1672 = vadd.f32 %v1510, %v1648
        %v1673 = vadd.f32 %v1511, %v1651
        %v1674 = vadd.f32 %v1512, %v1656
        %v1675 = vadd.f32 %v1513, %v1659
        %v1676 = vadd.f32 %v1514, %v1664
        %v1677 = vadd.f32 %v1515, %v1667
        %v1678 = vld [vmem:[%s4] sm:$0x1]
        %v1680 = vlaneseq
        %v1681 = vshrl.u32 %v1680, 7
        %v1682 = vsub.s32 0, %v1681
        %v1683 = vrot.slane %v1678, %v1682
        %v1685 = vadd.f32 %v1670, %v1683
        %v1686 = vadd.f32 %v1671, %v1683
        %v1687 = vadd.f32 %v1672, %v1683
        %v1688 = vadd.f32 %v1673, %v1683
        %v1689 = vadd.f32 %v1674, %v1683
        %v1690 = vadd.f32 %v1675, %v1683
        %v1691 = vadd.f32 %v1676, %v1683
        %v1692 = vadd.f32 %v1677, %v1683
        %v1693 = vadd.f32 %v1685, %v367
        %v1694 = vadd.f32 %v1686, %v368
        %v1695 = vadd.f32 %v1687, %v369
        %v1696 = vadd.f32 %v1688, %v370
        %v1697 = vadd.f32 %v1689, %v371
        %v1698 = vadd.f32 %v1690, %v372
        %v1699 = vadd.f32 %v1691, %v373
        %v1700 = vadd.f32 %v1692, %v374
        %v1701 = vmul.f32 %v1693, 0.70710677
        %v1702 = vmul.f32 %v1694, 0.70710677
        %v1703 = vmul.f32 %v1695, 0.70710677
        %v1704 = vmul.f32 %v1696, 0.70710677
        %v1705 = vmul.f32 %v1697, 0.70710677
        %v1706 = vmul.f32 %v1698, 0.70710677
        %v1707 = vmul.f32 %v1699, 0.70710677
        %v1708 = vmul.f32 %v1700, 0.70710677
        %v1709 = vpack.c.bf16 %v1702, %v1701
        %v1710 = vpack.c.bf16 %v1704, %v1703
        %v1711 = vpack.c.bf16 %v1706, %v1705
        %v1712 = vpack.c.bf16 %v1708, %v1707
        %v1713 = vld [vmem:[%s5] sm:$0xf]
        %v1714 = vld [vmem:[%s5 + $0x4] sm:$0xf]
        %v1715 = vld [vmem:[%s6] sm:$0x1]
        %v1717 = vlaneseq
        %v1718 = vshrl.u32 %v1717, 7
        %v1719 = vsub.s32 0, %v1718
        %v1720 = vrot.slane %v1715, %v1719
        %v1724 = vunpack.c.l.b16 %v1713
        %v1725 = vunpack.c.l.b16 %v1714
        %v1726 = vpack.c.b16 %v1725, %v1724
        %v1729 = vsel %vm394, %v1709, 0
        %v1732 = vsel %vm394, %v1710, 0
        %v1735 = vsel %vm394, %v1711, 0
        %v1738 = vsel %vm394, %v1712, 0
        %1740 = vmatprep.subr.bf16.mxu0 0
        %1741 = vmatpush1.bf16.msra.mxu0 %v1726
        %1742 = vmatprep.subr.bf16.mxu0 0
        %1743 = vmatpush1.bf16.msra.mxu0 0
        %1744 = vmatprep.subr.bf16.mxu0 0
        %1745 = vmatpush1.bf16.msra.mxu0 0
        %1746 = vmatprep.subr.bf16.mxu0 0
        %1747 = vmatpush1.bf16.msra.mxu0 0
        %1748 = vmatprep.subr.bf16.mxu0 0
        %1749 = vmatpush1.bf16.msra.mxu0 0
        %1750 = vmatprep.subr.bf16.mxu0 0
        %1751 = vmatpush1.bf16.msra.mxu0 0
        %1752 = vmatprep.subr.bf16.mxu0 0
        %1753 = vmatpush1.bf16.msra.mxu0 0
        %1754 = vmatprep.subr.bf16.mxu0 0
        %1755 = vmatpush1.bf16.msra.mxu0 0
        %1756 = vmatprep.subr.bf16.mxu0 0
        %1757 = vmatpush1.bf16.msra.mxu0 0
        %1758 = vmatprep.subr.bf16.mxu0 0
        %1759 = vmatpush1.bf16.msra.mxu0 0
        %1760 = vmatprep.subr.bf16.mxu0 0
        %1761 = vmatpush1.bf16.msra.mxu0 0
        %1762 = vmatprep.subr.bf16.mxu0 0
        %1763 = vmatpush1.bf16.msra.mxu0 0
        %1764 = vmatprep.subr.bf16.mxu0 0
        %1765 = vmatpush1.bf16.msra.mxu0 0
        %1766 = vmatprep.subr.bf16.mxu0 0
        %1767 = vmatpush1.bf16.msra.mxu0 0
        %1768 = vmatprep.subr.bf16.mxu0 0
        %1769 = vmatpush1.bf16.msra.mxu0 0
        %1770 = vmatprep.subr.bf16.mxu0 0
        %1771 = vmatpush1.bf16.msra.mxu0 0
        %1772 = vmatprep.mubr.bf16.mxu0 0
        %1773 = vmatmul.mubr.bf16.gmra.mrb[0].mxu0 %v1729
        %v1774 = vpop.f32.mrb[0].mxu0
        %v1775 = vadd.f32 %v1720, %v1774
        %v1776 = vpop.f32.mrb[0].mxu0
        %v1777 = vpop.f32.mrb[0].mxu0
        %v1778 = vadd.f32 %v1720, %v1777
        %v1779 = vpop.f32.mrb[0].mxu0
        %1780 = vmatprep.mubr.bf16.mxu0 0
        %1781 = vmatmul.mubr.bf16.gmra.mrb[0].mxu0 %v1732
        %v1782 = vpop.f32.mrb[0].mxu0
        %v1783 = vadd.f32 %v1720, %v1782
        %v1784 = vpop.f32.mrb[0].mxu0
        %v1785 = vpop.f32.mrb[0].mxu0
        %v1786 = vadd.f32 %v1720, %v1785
        %v1787 = vpop.f32.mrb[0].mxu0
        %1788 = vmatprep.mubr.bf16.mxu0 0
        %1789 = vmatmul.mubr.bf16.gmra.mrb[0].mxu0 %v1735
        %v1790 = vpop.f32.mrb[0].mxu0
        %v1791 = vadd.f32 %v1720, %v1790
        %v1792 = vpop.f32.mrb[0].mxu0
        %v1793 = vpop.f32.mrb[0].mxu0
        %v1794 = vadd.f32 %v1720, %v1793
        %v1795 = vpop.f32.mrb[0].mxu0
        %1796 = vmatprep.mubr.bf16.mxu0 0
        %1797 = vmatmul.mubr.bf16.gmra.mrb[0].mxu0 %v1738
        %v1798 = vpop.f32.mrb[0].mxu0
        %v1799 = vadd.f32 %v1720, %v1798
        %v1800 = vpop.f32.mrb[0].mxu0
        %v1801 = vpop.f32.mrb[0].mxu0
        %v1802 = vadd.f32 %v1720, %v1801
        %v1803 = vpop.f32.mrb[0].mxu0
        %1804 = vdwg.mxu0
        %v1805 = vmax.f32 %v1775, 0.0
        %v1806 = vmax.f32 %v1778, 0.0
        %v1807 = vmax.f32 %v1783, 0.0
        %v1808 = vmax.f32 %v1786, 0.0
        %v1809 = vmax.f32 %v1791, 0.0
        %v1810 = vmax.f32 %v1794, 0.0
        %v1811 = vmax.f32 %v1799, 0.0
        %v1812 = vmax.f32 %v1802, 0.0
        %v1813 = vpack.c.bf16 %v1806, %v1805
        %v1814 = vpack.c.bf16 %v1808, %v1807
        %v1815 = vpack.c.bf16 %v1810, %v1809
        %v1816 = vpack.c.bf16 %v1812, %v1811
        %v1817 = vld [vmem:[%s7] sm:$0xf]
        %v1818 = vld [vmem:[%s7 + $0x4] sm:$0xf]
        %v1819 = vld [vmem:[%s7 + $0x8] sm:$0xf]
        %v1820 = vld [vmem:[%s7 + $0xc] sm:$0xf]
        %v1821 = vld [vmem:[%s7 + $0x10] sm:$0xf]
        %v1822 = vld [vmem:[%s7 + $0x14] sm:$0xf]
        %v1823 = vld [vmem:[%s7 + $0x18] sm:$0xf]
        %v1824 = vld [vmem:[%s7 + $0x1c] sm:$0xf]
        %v1825 = vld [vmem:[%s8] sm:$0x1]
        %v1827 = vlaneseq
        %v1828 = vshrl.u32 %v1827, 7
        %v1829 = vsub.s32 0, %v1828
        %v1830 = vrot.slane %v1825, %v1829
        %v1840 = vunpack.c.l.b16 %v1817
        %v1841 = vunpack.c.l.b16 %v1818
        %v1842 = vunpack.c.l.b16 %v1819
        %v1843 = vunpack.c.l.b16 %v1820
        %v1844 = vunpack.c.l.b16 %v1821
        %v1845 = vunpack.c.l.b16 %v1822
        %v1846 = vunpack.c.l.b16 %v1823
        %v1847 = vunpack.c.l.b16 %v1824
        %v1848 = vpack.c.b16 %v1841, %v1840
        %v1849 = vpack.c.b16 %v1843, %v1842
        %v1850 = vpack.c.b16 %v1845, %v1844
        %v1851 = vpack.c.b16 %v1847, %v1846
        %vm1856 = vcmask 523264
        %v1858 = vsel %vm1856, %v1813, 0
        %v1861 = vsel %vm1856, %v1814, 0
        %v1864 = vsel %vm1856, %v1815, 0
        %v1867 = vsel %vm1856, %v1816, 0
        %1869 = vmatprep.subr.bf16.mxu0 0
        %1870 = vmatpush1.bf16.msra.mxu0 %v1848
        %1871 = vmatprep.subr.bf16.mxu0 0
        %1872 = vmatpush1.bf16.msra.mxu0 %v1849
        %1873 = vmatprep.subr.bf16.mxu0 0
        %1874 = vmatpush1.bf16.msra.mxu0 %v1850
        %1875 = vmatprep.subr.bf16.mxu0 0
        %1876 = vmatpush1.bf16.msra.mxu0 %v1851
        %1877 = vmatprep.subr.bf16.mxu0 0
        %1878 = vmatpush1.bf16.msra.mxu0 0
        %1879 = vmatprep.subr.bf16.mxu0 0
        %1880 = vmatpush1.bf16.msra.mxu0 0
        %1881 = vmatprep.subr.bf16.mxu0 0
        %1882 = vmatpush1.bf16.msra.mxu0 0
        %1883 = vmatprep.subr.bf16.mxu0 0
        %1884 = vmatpush1.bf16.msra.mxu0 0
        %1885 = vmatprep.subr.bf16.mxu0 0
        %1886 = vmatpush1.bf16.msra.mxu0 0
        %1887 = vmatprep.subr.bf16.mxu0 0
        %1888 = vmatpush1.bf16.msra.mxu0 0
        %1889 = vmatprep.subr.bf16.mxu0 0
        %1890 = vmatpush1.bf16.msra.mxu0 0
        %1891 = vmatprep.subr.bf16.mxu0 0
        %1892 = vmatpush1.bf16.msra.mxu0 0
        %1893 = vmatprep.subr.bf16.mxu0 0
        %1894 = vmatpush1.bf16.msra.mxu0 0
        %1895 = vmatprep.subr.bf16.mxu0 0
        %1896 = vmatpush1.bf16.msra.mxu0 0
        %1897 = vmatprep.subr.bf16.mxu0 0
        %1898 = vmatpush1.bf16.msra.mxu0 0
        %1899 = vmatprep.subr.bf16.mxu0 0
        %1900 = vmatpush1.bf16.msra.mxu0 0
        %1901 = vmatprep.mubr.bf16.mxu0 0
        %1902 = vmatmul.mubr.bf16.gmra.mrb[0].mxu0 %v1858
        %v1903 = vpop.f32.mrb[0].mxu0
        %v1904 = vadd.f32 %v1830, %v1903
        %v1905 = vpop.f32.mrb[0].mxu0
        %v1906 = vpop.f32.mrb[0].mxu0
        %v1907 = vadd.f32 %v1830, %v1906
        %v1908 = vpop.f32.mrb[0].mxu0
        %1909 = vmatprep.mubr.bf16.mxu0 0
        %1910 = vmatmul.mubr.bf16.gmra.mrb[0].mxu0 %v1861
        %v1911 = vpop.f32.mrb[0].mxu0
        %v1912 = vadd.f32 %v1830, %v1911
        %v1913 = vpop.f32.mrb[0].mxu0
        %v1914 = vpop.f32.mrb[0].mxu0
        %v1915 = vadd.f32 %v1830, %v1914
        %v1916 = vpop.f32.mrb[0].mxu0
        %1917 = vmatprep.mubr.bf16.mxu0 0
        %1918 = vmatmul.mubr.bf16.gmra.mrb[0].mxu0 %v1864
        %v1919 = vpop.f32.mrb[0].mxu0
        %v1920 = vadd.f32 %v1830, %v1919
        %v1921 = vpop.f32.mrb[0].mxu0
        %v1922 = vpop.f32.mrb[0].mxu0
        %v1923 = vadd.f32 %v1830, %v1922
        %v1924 = vpop.f32.mrb[0].mxu0
        %1925 = vmatprep.mubr.bf16.mxu0 0
        %1926 = vmatmul.mubr.bf16.gmra.mrb[0].mxu0 %v1867
        %v1927 = vpop.f32.mrb[0].mxu0
        %v1928 = vadd.f32 %v1830, %v1927
        %v1929 = vpop.f32.mrb[0].mxu0
        %v1930 = vpop.f32.mrb[0].mxu0
        %v1931 = vadd.f32 %v1830, %v1930
        %v1932 = vpop.f32.mrb[0].mxu0
        %1933 = vdwg.mxu0
        %v1934 = vadd.f32 %v1904, %v1701
        %v1935 = vadd.f32 %v1907, %v1702
        %v1936 = vadd.f32 %v1912, %v1703
        %v1937 = vadd.f32 %v1915, %v1704
        %v1938 = vadd.f32 %v1920, %v1705
        %v1939 = vadd.f32 %v1923, %v1706
        %v1940 = vadd.f32 %v1928, %v1707
        %v1941 = vadd.f32 %v1931, %v1708
        %v1942 = vmul.f32 %v1934, 0.70710677
        %v1943 = vmul.f32 %v1935, 0.70710677
        %v1944 = vmul.f32 %v1936, 0.70710677
        %v1945 = vmul.f32 %v1937, 0.70710677
        %v1946 = vmul.f32 %v1938, 0.70710677
        %v1947 = vmul.f32 %v1939, 0.70710677
        %v1948 = vmul.f32 %v1940, 0.70710677
        %v1949 = vmul.f32 %v1941, 0.70710677
        %1950 = vst.msk [vmem:[%s365] sm:$0xff] %vm394, %v1942
        %1951 = vst.msk [vmem:[%s365 + $0x8] sm:$0xff] %vm394, %v1943
        %1952 = vst.msk [vmem:[%s365 + $0x10] sm:$0xff] %vm394, %v1944
        %1953 = vst.msk [vmem:[%s365 + $0x18] sm:$0xff] %vm394, %v1945
        %1954 = vst.msk [vmem:[%s365 + $0x20] sm:$0xff] %vm394, %v1946
        %1955 = vst.msk [vmem:[%s365 + $0x28] sm:$0xff] %vm394, %v1947
        %1956 = vst.msk [vmem:[%s365 + $0x30] sm:$0xff] %vm394, %v1948
        %1957 = vst.msk [vmem:[%s365 + $0x38] sm:$0xff] %vm394, %v1949
        %s1958 = sand.u32 %s229, 1
        %s1959 = scalar_lea.sflag [#allocation5], %s1958
        %s1960 = sand.u32 %s229, 1
        %s1961 = smul.addr %s1960, 64
        %s1962 = scalar_lea.vmem [#allocation8], %s1961
        // Predicated region
        $region65: #{tpu_custom_call.1} parent=55 // pred_check
          %p1963 = pneg %p239
        $region66: #{tpu_custom_call.1} parent=55 // pred_check_branch
          %1965 = sbr.rel (%p1963) target = $region68
        $region67: #{tpu_custom_call.1} parent=55 // pred_region
          %s1967 = ssub.s32 1024, 1024
          %1968 = vsyncadd %s1959, %s1967
          %s1969 = smul.addr %s27, 8
          %s1970 = smul.addr %s1969, 128
          %s1971 = scalar_lea.hbm %s9, %s1970
          %s1972 = sshll.u32 %s1962, 4
          %s1973 = int_to_ptr.vmem [resolvable:$true] %s1972
          %1978 = dma.vmem_to_hbm [thread:$0]  %s1973, 1024, %s1971, %s1959, 128, 128, 8
        $region68: #{tpu_custom_call.1} parent=55 // pred_fallthru
          _
      $region56: #{tpu_custom_call.1} parent=5 // pred_fallthru
        _
      %p1979 = scmp.le.s32.totalorder 2, %s22
      // Predicated region
      $region69: #{tpu_custom_call.1} parent=5 // pred_check
        %p1980 = pneg %p1979
      $region70: #{tpu_custom_call.1} parent=5 // pred_check_branch
        %1982 = sbr.rel (%p1980) target = $region72
      $region71: #{tpu_custom_call.1} parent=5 // pred_region
        %s1983 = ssub.s32 %s22, 2
        // Predicated region
        $region73: #{tpu_custom_call.1} parent=71 // pred_check
          %p1984 = pneg %p245
        $region74: #{tpu_custom_call.1} parent=71 // pred_check_branch
          %1986 = sbr.rel (%p1984) target = $region76
        $region75: #{tpu_custom_call.1} parent=71 // pred_region
          %s1987 = sand.u32 %s230, 1
          %s1988 = scalar_lea.sflag [#allocation5], %s1987
          %s1989 = sand.u32 %s230, 1
          %s1990 = smul.addr %s1989, 64
          %s1991 = scalar_lea.vmem [#allocation8], %s1990
          %1992 = dma.done %s1988, 1024
        $region76: #{tpu_custom_call.1} parent=71 // pred_fallthru
          _
      $region72: #{tpu_custom_call.1} parent=5 // pred_fallthru
        _
    $region6: #{tpu_custom_call.1} parent=1 // loop_footer
      %s26 = sadd.s32 1, %s22
    $region7: #{tpu_custom_call.1} parent=1 // loop_footer_branch
      %21 = sbr.rel target = $region3
    $region8: #{tpu_custom_call.1} parent=1 // loop_exit
      _
    %1993 = vsyncpa [#allocation4], 1
    %s1994 = scalar_lea.sflag [#allocation4], 1
    %1995 = vsyncpa %s1994, 1
    %1996 = vsyncpa [#allocation7], 1
    %1997 = vsyncpa [#allocation5], 1
    %s1998 = scalar_lea.sflag [#allocation5], 1
    %1999 = vsyncpa %s1998, 1

</llo_original>
